<compile_context>
chip_gen: v7x
topology: tpu7x:2x2x1
jax: 0.10.0
libtpu: 0.0.40
codegen_flags: <defaults>
</compile_context>

<pallas_src>
import functools

import jax
import jax.numpy as jnp
from jax.experimental import pallas as pl
from jax.experimental.pallas import tpu as pltpu


# ----------------------------------------------------------------------------
# Kernels
# ----------------------------------------------------------------------------
def _head_kernel_single(x_ref, w_ref, shift_ref, o_ref):
    """Whole problem resident in VMEM: y = (x @ W_folded) + shift."""
    acc = jnp.dot(
        x_ref[...].astype(jnp.bfloat16),   # bf16 MXU-native matmul
        w_ref[...],                        # already bf16 (folded with BN scale)
        preferred_element_type=jnp.float32,
    )
    o_ref[...] = (acc + shift_ref[...]).astype(o_ref.dtype)


def _head_kernel_tiled(x_ref, w_ref, shift_ref, o_ref, acc_ref):
    """K-tiled fallback for feature sizes that do not fit VMEM in one block."""
    k = pl.program_id(0)

    @pl.when(k == 0)
    def _():
        acc_ref[...] = jnp.zeros_like(acc_ref)

    acc_ref[...] += jnp.dot(
        x_ref[...].astype(jnp.bfloat16),
        w_ref[...],
        preferred_element_type=jnp.float32,
    )

    @pl.when(k == pl.num_programs(0) - 1)
    def _():
        o_ref[...] = (acc_ref[...] + shift_ref[...]).astype(o_ref.dtype)


# ----------------------------------------------------------------------------
# Wrapper
# ----------------------------------------------------------------------------
# Conservative single-block budget: v7x scoped default is 32 MiB of 64 MiB VMEM.
_SINGLE_BLOCK_VMEM_BUDGET = 24 * 1024 * 1024


@functools.partial(jax.jit, static_argnames=("tk",))
def head_forward(features_nchw, w_t_bf16, shift, *, tk=2048):
    """fc Head forward.

    features_nchw : (B, C, H, W) backbone output (NCHW, like PyTorch), f32
    w_t_bf16      : (K, N)       Linear weight^T with BN scale folded in, bf16
    shift         : (1, N)       folded Linear-bias + BN shift, f32
    returns       : (B, N)       embedding, f32
    """
    B = features_nchw.shape[0]
    K, N = w_t_bf16.shape
    # nn.Flatten() on NCHW == row-major reshape (glue, no compute).
    x_flat = features_nchw.reshape(B, K)

    out_dtype = jnp.float32
    flops = 2 * B * K * N
    bytes_accessed = (
        B * K * x_flat.dtype.itemsize
        + K * N * w_t_bf16.dtype.itemsize
        + N * shift.dtype.itemsize
        + B * N * 4
    )
    cost = pl.CostEstimate(
        flops=flops, bytes_accessed=bytes_accessed, transcendentals=0
    )

    # Working set if everything is resident in VMEM at once.
    working_set = B * K * 4 + K * N * 2 + N * 4 + B * N * 4

    if working_set <= _SINGLE_BLOCK_VMEM_BUDGET:
        # Fast path: one invocation, no grid, no accumulator scratch.
        return pl.pallas_call(
            _head_kernel_single,
            out_shape=jax.ShapeDtypeStruct((B, N), out_dtype),
            in_specs=[
                pl.BlockSpec(memory_space=pltpu.MemorySpace.VMEM),  # activations
                pl.BlockSpec(memory_space=pltpu.MemorySpace.VMEM),  # weights
                pl.BlockSpec(memory_space=pltpu.MemorySpace.VMEM),  # shift
            ],
            out_specs=pl.BlockSpec(memory_space=pltpu.MemorySpace.VMEM),
            cost_estimate=cost,
        )(x_flat, w_t_bf16, shift)

    # Fallback: K-tiled reduction with padding so a non-multiple K is never
    # silently truncated (zero padding contributes nothing to the dot).
    k_tiles = pl.cdiv(K, tk)
    K_pad = k_tiles * tk
    if K_pad != K:
        x_flat = jnp.pad(x_flat, ((0, 0), (0, K_pad - K)))
        w_t_bf16 = jnp.pad(w_t_bf16, ((0, K_pad - K), (0, 0)))

    return pl.pallas_call(
        _head_kernel_tiled,
        out_shape=jax.ShapeDtypeStruct((B, N), out_dtype),
        grid_spec=pltpu.PrefetchScalarGridSpec(
            num_scalar_prefetch=0,
            grid=(k_tiles,),
            in_specs=[
                pl.BlockSpec((B, tk), lambda k: (0, k)),       # activations
                pl.BlockSpec((tk, N), lambda k: (k, 0),        # weights (stream)
                             pipeline_mode=pl.Buffered(3)),
                pl.BlockSpec((1, N), lambda k: (0, 0)),        # shift (resident)
            ],
            out_specs=pl.BlockSpec((B, N), lambda k: (0, 0)),
            scratch_shapes=[pltpu.VMEM((B, N), jnp.float32)],
        ),
        compiler_params=pltpu.CompilerParams(
            dimension_semantics=("arbitrary",),  # K is a reduction axis
        ),
        cost_estimate=cost,
    )(x_flat, w_t_bf16, shift)


# ----------------------------------------------------------------------------
# Deterministic parameter construction (mirrors init_weight()).
# ----------------------------------------------------------------------------
def make_head_params(key, in_features, emb_size, eps=1e-5):
    # nn.Linear: xavier_normal_(weight), bias = 0
    std = (2.0 / (in_features + emb_size)) ** 0.5
    w = jax.random.normal(key, (emb_size, in_features), dtype=jnp.float32) * std
    b = jnp.zeros((emb_size,), jnp.float32)

    # nn.BatchNorm1d (affine, eval semantics): gamma=1, beta=0, mean=0, var=1
    gamma = jnp.ones((emb_size,), jnp.float32)
    beta = jnp.zeros((emb_size,), jnp.float32)
    running_mean = jnp.zeros((emb_size,), jnp.float32)
    running_var = jnp.ones((emb_size,), jnp.float32)

    # Fold BN into the weights (one-time transform):
    #   y = ((x @ W^T + b) - mean) * s + beta,   s = gamma / sqrt(var + eps)
    #     = x @ (W^T * s) + ((b - mean) * s + beta)
    s = gamma * jax.lax.rsqrt(running_var + eps)
    w_t_folded = (jnp.transpose(w) * s[None, :]).astype(jnp.bfloat16)  # (K, N)
    shift = ((b - running_mean) * s + beta).reshape(1, emb_size).astype(jnp.float32)

    raw = (w, b, gamma, beta, running_mean, running_var, eps)
    return w_t_folded, shift, raw


def reference_forward(features_nchw, raw_params):
    """Plain-JAX reference of Dropout(0)->Flatten->Linear->BatchNorm1d(eval)."""
    w, b, gamma, beta, mean, var, eps = raw_params
    B = features_nchw.shape[0]
    x = features_nchw.reshape(B, -1)
    y = x @ w.T + b
    return (y - mean) * gamma * jax.lax.rsqrt(var + eps) + beta


# ----------------------------------------------------------------------------
if __name__ == "__main__":
    # Small shapes consistent with the Head: features (B, C, H, W) -> (B, emb).
    B, C, H, W = 8, 64, 8, 8          # K = C*H*W = 4096
    EMB = 128

    key = jax.random.PRNGKey(0)
    k_feat, k_w = jax.random.split(key)

    features = jax.random.normal(k_feat, (B, C, H, W), dtype=jnp.float32)
    w_t, shift, raw = make_head_params(k_w, C * H * W, EMB)

    out = jax.block_until_ready(head_forward(features, w_t, shift))

    ref = reference_forward(features, raw)
    assert out.shape == (B, EMB)
    # bf16 weights/activations => loosened tolerance vs f32 reference.
    assert jnp.allclose(out, ref, atol=6e-2, rtol=6e-2), "mismatch vs reference"

    print("KERNEL_OK")
</pallas_src>

<mosaic_0001>
module attributes {stable_mosaic.version = 11 : i64} {
  func.func @_head_kernel_single(%arg0: memref<8x4096xf32, #tpu.memory_space<vmem>>, %arg1: memref<4096x128xbf16, #tpu.memory_space<vmem>>, %arg2: memref<1x128xf32, #tpu.memory_space<vmem>>, %arg3: memref<8x128xf32, #tpu.memory_space<vmem>>) attributes {dimension_semantics = [], scalar_prefetch = 0 : i64, scratch_operands = 0 : i64, tpu.core_type = #tpu.core_type<tc>} {
    %c0 = arith.constant 0 : index
    %c0_0 = arith.constant 0 : index
    %0 = vector.load %arg0[%c0, %c0_0] : memref<8x4096xf32, #tpu.memory_space<vmem>>, vector<8x4096xf32>
    %1 = arith.truncf %0 : vector<8x4096xf32> to vector<8x4096xbf16>
    %c0_1 = arith.constant 0 : index
    %c0_2 = arith.constant 0 : index
    %2 = vector.load %arg1[%c0_1, %c0_2] : memref<4096x128xbf16, #tpu.memory_space<vmem>>, vector<4096x128xbf16>
    %cst = arith.constant dense<0.000000e+00> : vector<8x128xf32>
    %3 = tpu.matmul %1, %2, %cst {dimension_numbers = #tpu.dot_dimension_numbers<[1], [0], [0], [1], [0, 0, 1, 1], [], []>} : vector<8x4096xbf16>, vector<4096x128xbf16>, vector<8x128xf32> -> vector<8x128xf32>
    %c0_3 = arith.constant 0 : index
    %c0_4 = arith.constant 0 : index
    %4 = vector.load %arg2[%c0_3, %c0_4] : memref<1x128xf32, #tpu.memory_space<vmem>>, vector<1x128xf32>
    %5 = vector.broadcast %4 : vector<1x128xf32> to vector<8x128xf32>
    %6 = arith.addf %3, %5 : vector<8x128xf32>
    %c0_5 = arith.constant 0 : index
    %c0_6 = arith.constant 0 : index
    %7 = vector.load %arg3[%c0_5, %c0_6] : memref<8x128xf32, #tpu.memory_space<vmem>>, vector<8x128xf32>
    tpu.vector_store %arg3[%c0_5, %c0_6], %6 {strides = array<i32>} : memref<8x128xf32, #tpu.memory_space<vmem>>, vector<8x128xf32>,
    return
  }
}

</mosaic_0001>

<llo_original>
// kernel: head_forward.1
$region0: #{head_forward.1}
  #allocation0 [shape = 'u32[]', space=smem, size = 0x4, offset = 0x4, fixed_abs, tag = 'smem constant byte address 0x4 - core index']
  #allocation1 [shape = 'u32[144,128]{1,0:T(1,128)}', space=vmem, size = 0x12000, scoped, tag = 'internal scratch']
  %s0 = inlined_call_operand.vmem [shape: f32[8,4096], index: 0, kind: input, shape index: {}]
  %s1 = inlined_call_operand.vmem [shape: bf16[4096,128], index: 1, kind: input, shape index: {}]
  %s2 = inlined_call_operand.vmem [shape: f32[1,128], index: 2, kind: input, shape index: {}]
  %s3 = inlined_call_operand.hbm [shape: f32[8,128], index: 3, kind: output, shape index: {}]
  %s4 = sld [smem:[#allocation0]]
  $region22: #{head_forward.1} parent=0
    _
  %s6 = ssub.s32 1, %s4
  %s7 = scalar_select 0, %s6, %s4
  $region1: #{head_forward.1} parent=0
    #allocation2 [shape = 'u8[4096]{0}', space=vmem, size = 0x1000, scoped, tag = 'output window, operand 0, single buffered']
    #allocation3 [shape = 's32[1]{0}', space=sflag, size = 0x4, scoped, tag = 'scoped memory for head_forward.1']
    %8 = vsyncpa [#allocation3], 0
    // Predicated region
    $region2: #{head_forward.1} parent=1 // pred_check
      _
    $region3: #{head_forward.1} parent=1 // pred_check_branch
      %10 = sbr.rel (0) target = $region5
    $region4: #{head_forward.1} parent=1 // pred_region
      _
    $region5: #{head_forward.1} parent=1 // pred_fallthru
      _
    // Predicated region
    $region6: #{head_forward.1} parent=1 // pred_check
      _
    $region7: #{head_forward.1} parent=1 // pred_check_branch
      %12 = sbr.rel (0) target = $region9
    $region8: #{head_forward.1} parent=1 // pred_region
      _
    $region9: #{head_forward.1} parent=1 // pred_fallthru
      _
    // Predicated region
    $region10: #{head_forward.1} parent=1 // pred_check
      _
    $region11: #{head_forward.1} parent=1 // pred_check_branch
      %14 = sbr.rel (0) target = $region13
    $region12: #{head_forward.1} parent=1 // pred_region
      _
    $region13: #{head_forward.1} parent=1 // pred_fallthru
      _
    %v16 = vld [vmem:[%s0] sm:$0xff]
    %v17 = vld [vmem:[%s0 + $0x8] sm:$0xff]
    %v18 = vld [vmem:[%s0 + $0x10] sm:$0xff]
    %v19 = vld [vmem:[%s0 + $0x18] sm:$0xff]
    %v20 = vld [vmem:[%s0 + $0x20] sm:$0xff]
    %v21 = vld [vmem:[%s0 + $0x28] sm:$0xff]
    %v22 = vld [vmem:[%s0 + $0x30] sm:$0xff]
    %v23 = vld [vmem:[%s0 + $0x38] sm:$0xff]
    %v24 = vld [vmem:[%s0 + $0x40] sm:$0xff]
    %v25 = vld [vmem:[%s0 + $0x48] sm:$0xff]
    %v26 = vld [vmem:[%s0 + $0x50] sm:$0xff]
    %v27 = vld [vmem:[%s0 + $0x58] sm:$0xff]
    %v28 = vld [vmem:[%s0 + $0x60] sm:$0xff]
    %v29 = vld [vmem:[%s0 + $0x68] sm:$0xff]
    %v30 = vld [vmem:[%s0 + $0x70] sm:$0xff]
    %v31 = vld [vmem:[%s0 + $0x78] sm:$0xff]
    %v32 = vld [vmem:[%s0 + $0x80] sm:$0xff]
    %v33 = vld [vmem:[%s0 + $0x88] sm:$0xff]
    %v34 = vld [vmem:[%s0 + $0x90] sm:$0xff]
    %v35 = vld [vmem:[%s0 + $0x98] sm:$0xff]
    %v36 = vld [vmem:[%s0 + $0xa0] sm:$0xff]
    %v37 = vld [vmem:[%s0 + $0xa8] sm:$0xff]
    %v38 = vld [vmem:[%s0 + $0xb0] sm:$0xff]
    %v39 = vld [vmem:[%s0 + $0xb8] sm:$0xff]
    %v40 = vld [vmem:[%s0 + $0xc0] sm:$0xff]
    %v41 = vld [vmem:[%s0 + $0xc8] sm:$0xff]
    %v42 = vld [vmem:[%s0 + $0xd0] sm:$0xff]
    %v43 = vld [vmem:[%s0 + $0xd8] sm:$0xff]
    %v44 = vld [vmem:[%s0 + $0xe0] sm:$0xff]
    %v45 = vld [vmem:[%s0 + $0xe8] sm:$0xff]
    %v46 = vld [vmem:[%s0 + $0xf0] sm:$0xff]
    %v47 = vld [vmem:[%s0 + $0xf8] sm:$0xff]
    %v48 = vpack.c.bf16 %v16, %v16
    %v49 = vpack.c.bf16 %v17, %v17
    %v50 = vpack.c.bf16 %v18, %v18
    %v51 = vpack.c.bf16 %v19, %v19
    %v52 = vpack.c.bf16 %v20, %v20
    %v53 = vpack.c.bf16 %v21, %v21
    %v54 = vpack.c.bf16 %v22, %v22
    %v55 = vpack.c.bf16 %v23, %v23
    %v56 = vpack.c.bf16 %v24, %v24
    %v57 = vpack.c.bf16 %v25, %v25
    %v58 = vpack.c.bf16 %v26, %v26
    %v59 = vpack.c.bf16 %v27, %v27
    %v60 = vpack.c.bf16 %v28, %v28
    %v61 = vpack.c.bf16 %v29, %v29
    %v62 = vpack.c.bf16 %v30, %v30
    %v63 = vpack.c.bf16 %v31, %v31
    %v64 = vpack.c.bf16 %v32, %v32
    %v65 = vpack.c.bf16 %v33, %v33
    %v66 = vpack.c.bf16 %v34, %v34
    %v67 = vpack.c.bf16 %v35, %v35
    %v68 = vpack.c.bf16 %v36, %v36
    %v69 = vpack.c.bf16 %v37, %v37
    %v70 = vpack.c.bf16 %v38, %v38
    %v71 = vpack.c.bf16 %v39, %v39
    %v72 = vpack.c.bf16 %v40, %v40
    %v73 = vpack.c.bf16 %v41, %v41
    %v74 = vpack.c.bf16 %v42, %v42
    %v75 = vpack.c.bf16 %v43, %v43
    %v76 = vpack.c.bf16 %v44, %v44
    %v77 = vpack.c.bf16 %v45, %v45
    %v78 = vpack.c.bf16 %v46, %v46
    %v79 = vpack.c.bf16 %v47, %v47
    %v80 = vld [vmem:[%s1] sm:$0xf]
    %v81 = vld [vmem:[%s1 + $0x4] sm:$0xf]
    %v82 = vld [vmem:[%s1 + $0x8] sm:$0xf]
    %v83 = vld [vmem:[%s1 + $0xc] sm:$0xf]
    %v84 = vld [vmem:[%s1 + $0x10] sm:$0xf]
    %v85 = vld [vmem:[%s1 + $0x14] sm:$0xf]
    %v86 = vld [vmem:[%s1 + $0x18] sm:$0xf]
    %v87 = vld [vmem:[%s1 + $0x1c] sm:$0xf]
    %v88 = vld [vmem:[%s1 + $0x20] sm:$0xf]
    %v89 = vld [vmem:[%s1 + $0x24] sm:$0xf]
    %v90 = vld [vmem:[%s1 + $0x28] sm:$0xf]
    %v91 = vld [vmem:[%s1 + $0x2c] sm:$0xf]
    %v92 = vld [vmem:[%s1 + $0x30] sm:$0xf]
    %v93 = vld [vmem:[%s1 + $0x34] sm:$0xf]
    %v94 = vld [vmem:[%s1 + $0x38] sm:$0xf]
    %v95 = vld [vmem:[%s1 + $0x3c] sm:$0xf]
    %v96 = vld [vmem:[%s1 + $0x40] sm:$0xf]
    %v97 = vld [vmem:[%s1 + $0x44] sm:$0xf]
    %v98 = vld [vmem:[%s1 + $0x48] sm:$0xf]
    %v99 = vld [vmem:[%s1 + $0x4c] sm:$0xf]
    %v100 = vld [vmem:[%s1 + $0x50] sm:$0xf]
    %v101 = vld [vmem:[%s1 + $0x54] sm:$0xf]
    %v102 = vld [vmem:[%s1 + $0x58] sm:$0xf]
    %v103 = vld [vmem:[%s1 + $0x5c] sm:$0xf]
    %v104 = vld [vmem:[%s1 + $0x60] sm:$0xf]
    %v105 = vld [vmem:[%s1 + $0x64] sm:$0xf]
    %v106 = vld [vmem:[%s1 + $0x68] sm:$0xf]
    %v107 = vld [vmem:[%s1 + $0x6c] sm:$0xf]
    %v108 = vld [vmem:[%s1 + $0x70] sm:$0xf]
    %v109 = vld [vmem:[%s1 + $0x74] sm:$0xf]
    %v110 = vld [vmem:[%s1 + $0x78] sm:$0xf]
    %v111 = vld [vmem:[%s1 + $0x7c] sm:$0xf]
    %v112 = vld [vmem:[%s1 + $0x80] sm:$0xf]
    %v113 = vld [vmem:[%s1 + $0x84] sm:$0xf]
    %v114 = vld [vmem:[%s1 + $0x88] sm:$0xf]
    %v115 = vld [vmem:[%s1 + $0x8c] sm:$0xf]
    %v116 = vld [vmem:[%s1 + $0x90] sm:$0xf]
    %v117 = vld [vmem:[%s1 + $0x94] sm:$0xf]
    %v118 = vld [vmem:[%s1 + $0x98] sm:$0xf]
    %v119 = vld [vmem:[%s1 + $0x9c] sm:$0xf]
    %v120 = vld [vmem:[%s1 + $0xa0] sm:$0xf]
    %v121 = vld [vmem:[%s1 + $0xa4] sm:$0xf]
    %v122 = vld [vmem:[%s1 + $0xa8] sm:$0xf]
    %v123 = vld [vmem:[%s1 + $0xac] sm:$0xf]
    %v124 = vld [vmem:[%s1 + $0xb0] sm:$0xf]
    %v125 = vld [vmem:[%s1 + $0xb4] sm:$0xf]
    %v126 = vld [vmem:[%s1 + $0xb8] sm:$0xf]
    %v127 = vld [vmem:[%s1 + $0xbc] sm:$0xf]
    %v128 = vld [vmem:[%s1 + $0xc0] sm:$0xf]
    %v129 = vld [vmem:[%s1 + $0xc4] sm:$0xf]
    %v130 = vld [vmem:[%s1 + $0xc8] sm:$0xf]
    %v131 = vld [vmem:[%s1 + $0xcc] sm:$0xf]
    %v132 = vld [vmem:[%s1 + $0xd0] sm:$0xf]
    %v133 = vld [vmem:[%s1 + $0xd4] sm:$0xf]
    %v134 = vld [vmem:[%s1 + $0xd8] sm:$0xf]
    %v135 = vld [vmem:[%s1 + $0xdc] sm:$0xf]
    %v136 = vld [vmem:[%s1 + $0xe0] sm:$0xf]
    %v137 = vld [vmem:[%s1 + $0xe4] sm:$0xf]
    %v138 = vld [vmem:[%s1 + $0xe8] sm:$0xf]
    %v139 = vld [vmem:[%s1 + $0xec] sm:$0xf]
    %v140 = vld [vmem:[%s1 + $0xf0] sm:$0xf]
    %v141 = vld [vmem:[%s1 + $0xf4] sm:$0xf]
    %v142 = vld [vmem:[%s1 + $0xf8] sm:$0xf]
    %v143 = vld [vmem:[%s1 + $0xfc] sm:$0xf]
    %v144 = vld [vmem:[%s1 + $0x100] sm:$0xf]
    %v145 = vld [vmem:[%s1 + $0x104] sm:$0xf]
    %v146 = vld [vmem:[%s1 + $0x108] sm:$0xf]
    %v147 = vld [vmem:[%s1 + $0x10c] sm:$0xf]
    %v148 = vld [vmem:[%s1 + $0x110] sm:$0xf]
    %v149 = vld [vmem:[%s1 + $0x114] sm:$0xf]
    %v150 = vld [vmem:[%s1 + $0x118] sm:$0xf]
    %v151 = vld [vmem:[%s1 + $0x11c] sm:$0xf]
    %v152 = vld [vmem:[%s1 + $0x120] sm:$0xf]
    %v153 = vld [vmem:[%s1 + $0x124] sm:$0xf]
    %v154 = vld [vmem:[%s1 + $0x128] sm:$0xf]
    %v155 = vld [vmem:[%s1 + $0x12c] sm:$0xf]
    %v156 = vld [vmem:[%s1 + $0x130] sm:$0xf]
    %v157 = vld [vmem:[%s1 + $0x134] sm:$0xf]
    %v158 = vld [vmem:[%s1 + $0x138] sm:$0xf]
    %v159 = vld [vmem:[%s1 + $0x13c] sm:$0xf]
    %v160 = vld [vmem:[%s1 + $0x140] sm:$0xf]
    %v161 = vld [vmem:[%s1 + $0x144] sm:$0xf]
    %v162 = vld [vmem:[%s1 + $0x148] sm:$0xf]
    %v163 = vld [vmem:[%s1 + $0x14c] sm:$0xf]
    %v164 = vld [vmem:[%s1 + $0x150] sm:$0xf]
    %v165 = vld [vmem:[%s1 + $0x154] sm:$0xf]
    %v166 = vld [vmem:[%s1 + $0x158] sm:$0xf]
    %v167 = vld [vmem:[%s1 + $0x15c] sm:$0xf]
    %v168 = vld [vmem:[%s1 + $0x160] sm:$0xf]
    %v169 = vld [vmem:[%s1 + $0x164] sm:$0xf]
    %v170 = vld [vmem:[%s1 + $0x168] sm:$0xf]
    %v171 = vld [vmem:[%s1 + $0x16c] sm:$0xf]
    %v172 = vld [vmem:[%s1 + $0x170] sm:$0xf]
    %v173 = vld [vmem:[%s1 + $0x174] sm:$0xf]
    %v174 = vld [vmem:[%s1 + $0x178] sm:$0xf]
    %v175 = vld [vmem:[%s1 + $0x17c] sm:$0xf]
    %v176 = vld [vmem:[%s1 + $0x180] sm:$0xf]
    %v177 = vld [vmem:[%s1 + $0x184] sm:$0xf]
    %v178 = vld [vmem:[%s1 + $0x188] sm:$0xf]
    %v179 = vld [vmem:[%s1 + $0x18c] sm:$0xf]
    %v180 = vld [vmem:[%s1 + $0x190] sm:$0xf]
    %v181 = vld [vmem:[%s1 + $0x194] sm:$0xf]
    %v182 = vld [vmem:[%s1 + $0x198] sm:$0xf]
    %v183 = vld [vmem:[%s1 + $0x19c] sm:$0xf]
    %v184 = vld [vmem:[%s1 + $0x1a0] sm:$0xf]
    %v185 = vld [vmem:[%s1 + $0x1a4] sm:$0xf]
    %v186 = vld [vmem:[%s1 + $0x1a8] sm:$0xf]
    %v187 = vld [vmem:[%s1 + $0x1ac] sm:$0xf]
    %v188 = vld [vmem:[%s1 + $0x1b0] sm:$0xf]
    %v189 = vld [vmem:[%s1 + $0x1b4] sm:$0xf]
    %v190 = vld [vmem:[%s1 + $0x1b8] sm:$0xf]
    %v191 = vld [vmem:[%s1 + $0x1bc] sm:$0xf]
    %v192 = vld [vmem:[%s1 + $0x1c0] sm:$0xf]
    %v193 = vld [vmem:[%s1 + $0x1c4] sm:$0xf]
    %v194 = vld [vmem:[%s1 + $0x1c8] sm:$0xf]
    %v195 = vld [vmem:[%s1 + $0x1cc] sm:$0xf]
    %v196 = vld [vmem:[%s1 + $0x1d0] sm:$0xf]
    %v197 = vld [vmem:[%s1 + $0x1d4] sm:$0xf]
    %v198 = vld [vmem:[%s1 + $0x1d8] sm:$0xf]
    %v199 = vld [vmem:[%s1 + $0x1dc] sm:$0xf]
    %v200 = vld [vmem:[%s1 + $0x1e0] sm:$0xf]
    %v201 = vld [vmem:[%s1 + $0x1e4] sm:$0xf]
    %v202 = vld [vmem:[%s1 + $0x1e8] sm:$0xf]
    %v203 = vld [vmem:[%s1 + $0x1ec] sm:$0xf]
    %v204 = vld [vmem:[%s1 + $0x1f0] sm:$0xf]
    %v205 = vld [vmem:[%s1 + $0x1f4] sm:$0xf]
    %v206 = vld [vmem:[%s1 + $0x1f8] sm:$0xf]
    %v207 = vld [vmem:[%s1 + $0x1fc] sm:$0xf]
    %v208 = vld [vmem:[%s1 + $0x200] sm:$0xf]
    %v209 = vld [vmem:[%s1 + $0x204] sm:$0xf]
    %v210 = vld [vmem:[%s1 + $0x208] sm:$0xf]
    %v211 = vld [vmem:[%s1 + $0x20c] sm:$0xf]
    %v212 = vld [vmem:[%s1 + $0x210] sm:$0xf]
    %v213 = vld [vmem:[%s1 + $0x214] sm:$0xf]
    %v214 = vld [vmem:[%s1 + $0x218] sm:$0xf]
    %v215 = vld [vmem:[%s1 + $0x21c] sm:$0xf]
    %v216 = vld [vmem:[%s1 + $0x220] sm:$0xf]
    %v217 = vld [vmem:[%s1 + $0x224] sm:$0xf]
    %v218 = vld [vmem:[%s1 + $0x228] sm:$0xf]
    %v219 = vld [vmem:[%s1 + $0x22c] sm:$0xf]
    %v220 = vld [vmem:[%s1 + $0x230] sm:$0xf]
    %v221 = vld [vmem:[%s1 + $0x234] sm:$0xf]
    %v222 = vld [vmem:[%s1 + $0x238] sm:$0xf]
    %v223 = vld [vmem:[%s1 + $0x23c] sm:$0xf]
    %v224 = vld [vmem:[%s1 + $0x240] sm:$0xf]
    %v225 = vld [vmem:[%s1 + $0x244] sm:$0xf]
    %v226 = vld [vmem:[%s1 + $0x248] sm:$0xf]
    %v227 = vld [vmem:[%s1 + $0x24c] sm:$0xf]
    %v228 = vld [vmem:[%s1 + $0x250] sm:$0xf]
    %v229 = vld [vmem:[%s1 + $0x254] sm:$0xf]
    %v230 = vld [vmem:[%s1 + $0x258] sm:$0xf]
    %v231 = vld [vmem:[%s1 + $0x25c] sm:$0xf]
    %v232 = vld [vmem:[%s1 + $0x260] sm:$0xf]
    %v233 = vld [vmem:[%s1 + $0x264] sm:$0xf]
    %v234 = vld [vmem:[%s1 + $0x268] sm:$0xf]
    %v235 = vld [vmem:[%s1 + $0x26c] sm:$0xf]
    %v236 = vld [vmem:[%s1 + $0x270] sm:$0xf]
    %v237 = vld [vmem:[%s1 + $0x274] sm:$0xf]
    %v238 = vld [vmem:[%s1 + $0x278] sm:$0xf]
    %v239 = vld [vmem:[%s1 + $0x27c] sm:$0xf]
    %v240 = vld [vmem:[%s1 + $0x280] sm:$0xf]
    %v241 = vld [vmem:[%s1 + $0x284] sm:$0xf]
    %v242 = vld [vmem:[%s1 + $0x288] sm:$0xf]
    %v243 = vld [vmem:[%s1 + $0x28c] sm:$0xf]
    %v244 = vld [vmem:[%s1 + $0x290] sm:$0xf]
    %v245 = vld [vmem:[%s1 + $0x294] sm:$0xf]
    %v246 = vld [vmem:[%s1 + $0x298] sm:$0xf]
    %v247 = vld [vmem:[%s1 + $0x29c] sm:$0xf]
    %v248 = vld [vmem:[%s1 + $0x2a0] sm:$0xf]
    %v249 = vld [vmem:[%s1 + $0x2a4] sm:$0xf]
    %v250 = vld [vmem:[%s1 + $0x2a8] sm:$0xf]
    %v251 = vld [vmem:[%s1 + $0x2ac] sm:$0xf]
    %v252 = vld [vmem:[%s1 + $0x2b0] sm:$0xf]
    %v253 = vld [vmem:[%s1 + $0x2b4] sm:$0xf]
    %v254 = vld [vmem:[%s1 + $0x2b8] sm:$0xf]
    %v255 = vld [vmem:[%s1 + $0x2bc] sm:$0xf]
    %v256 = vld [vmem:[%s1 + $0x2c0] sm:$0xf]
    %v257 = vld [vmem:[%s1 + $0x2c4] sm:$0xf]
    %v258 = vld [vmem:[%s1 + $0x2c8] sm:$0xf]
    %v259 = vld [vmem:[%s1 + $0x2cc] sm:$0xf]
    %v260 = vld [vmem:[%s1 + $0x2d0] sm:$0xf]
    %v261 = vld [vmem:[%s1 + $0x2d4] sm:$0xf]
    %v262 = vld [vmem:[%s1 + $0x2d8] sm:$0xf]
    %v263 = vld [vmem:[%s1 + $0x2dc] sm:$0xf]
    %v264 = vld [vmem:[%s1 + $0x2e0] sm:$0xf]
    %v265 = vld [vmem:[%s1 + $0x2e4] sm:$0xf]
    %v266 = vld [vmem:[%s1 + $0x2e8] sm:$0xf]
    %v267 = vld [vmem:[%s1 + $0x2ec] sm:$0xf]
    %v268 = vld [vmem:[%s1 + $0x2f0] sm:$0xf]
    %v269 = vld [vmem:[%s1 + $0x2f4] sm:$0xf]
    %v270 = vld [vmem:[%s1 + $0x2f8] sm:$0xf]
    %v271 = vld [vmem:[%s1 + $0x2fc] sm:$0xf]
    %v272 = vld [vmem:[%s1 + $0x300] sm:$0xf]
    %v273 = vld [vmem:[%s1 + $0x304] sm:$0xf]
    %v274 = vld [vmem:[%s1 + $0x308] sm:$0xf]
    %v275 = vld [vmem:[%s1 + $0x30c] sm:$0xf]
    %v276 = vld [vmem:[%s1 + $0x310] sm:$0xf]
    %v277 = vld [vmem:[%s1 + $0x314] sm:$0xf]
    %v278 = vld [vmem:[%s1 + $0x318] sm:$0xf]
    %v279 = vld [vmem:[%s1 + $0x31c] sm:$0xf]
    %v280 = vld [vmem:[%s1 + $0x320] sm:$0xf]
    %v281 = vld [vmem:[%s1 + $0x324] sm:$0xf]
    %v282 = vld [vmem:[%s1 + $0x328] sm:$0xf]
    %v283 = vld [vmem:[%s1 + $0x32c] sm:$0xf]
    %v284 = vld [vmem:[%s1 + $0x330] sm:$0xf]
    %v285 = vld [vmem:[%s1 + $0x334] sm:$0xf]
    %v286 = vld [vmem:[%s1 + $0x338] sm:$0xf]
    %v287 = vld [vmem:[%s1 + $0x33c] sm:$0xf]
    %v288 = vld [vmem:[%s1 + $0x340] sm:$0xf]
    %v289 = vld [vmem:[%s1 + $0x344] sm:$0xf]
    %v290 = vld [vmem:[%s1 + $0x348] sm:$0xf]
    %v291 = vld [vmem:[%s1 + $0x34c] sm:$0xf]
    %v292 = vld [vmem:[%s1 + $0x350] sm:$0xf]
    %v293 = vld [vmem:[%s1 + $0x354] sm:$0xf]
    %v294 = vld [vmem:[%s1 + $0x358] sm:$0xf]
    %v295 = vld [vmem:[%s1 + $0x35c] sm:$0xf]
    %v296 = vld [vmem:[%s1 + $0x360] sm:$0xf]
    %v297 = vld [vmem:[%s1 + $0x364] sm:$0xf]
    %v298 = vld [vmem:[%s1 + $0x368] sm:$0xf]
    %v299 = vld [vmem:[%s1 + $0x36c] sm:$0xf]
    %v300 = vld [vmem:[%s1 + $0x370] sm:$0xf]
    %v301 = vld [vmem:[%s1 + $0x374] sm:$0xf]
    %v302 = vld [vmem:[%s1 + $0x378] sm:$0xf]
    %v303 = vld [vmem:[%s1 + $0x37c] sm:$0xf]
    %v304 = vld [vmem:[%s1 + $0x380] sm:$0xf]
    %v305 = vld [vmem:[%s1 + $0x384] sm:$0xf]
    %v306 = vld [vmem:[%s1 + $0x388] sm:$0xf]
    %v307 = vld [vmem:[%s1 + $0x38c] sm:$0xf]
    %v308 = vld [vmem:[%s1 + $0x390] sm:$0xf]
    %v309 = vld [vmem:[%s1 + $0x394] sm:$0xf]
    %v310 = vld [vmem:[%s1 + $0x398] sm:$0xf]
    %v311 = vld [vmem:[%s1 + $0x39c] sm:$0xf]
    %v312 = vld [vmem:[%s1 + $0x3a0] sm:$0xf]
    %v313 = vld [vmem:[%s1 + $0x3a4] sm:$0xf]
    %v314 = vld [vmem:[%s1 + $0x3a8] sm:$0xf]
    %v315 = vld [vmem:[%s1 + $0x3ac] sm:$0xf]
    %v316 = vld [vmem:[%s1 + $0x3b0] sm:$0xf]
    %v317 = vld [vmem:[%s1 + $0x3b4] sm:$0xf]
    %v318 = vld [vmem:[%s1 + $0x3b8] sm:$0xf]
    %v319 = vld [vmem:[%s1 + $0x3bc] sm:$0xf]
    %v320 = vld [vmem:[%s1 + $0x3c0] sm:$0xf]
    %v321 = vld [vmem:[%s1 + $0x3c4] sm:$0xf]
    %v322 = vld [vmem:[%s1 + $0x3c8] sm:$0xf]
    %v323 = vld [vmem:[%s1 + $0x3cc] sm:$0xf]
    %v324 = vld [vmem:[%s1 + $0x3d0] sm:$0xf]
    %v325 = vld [vmem:[%s1 + $0x3d4] sm:$0xf]
    %v326 = vld [vmem:[%s1 + $0x3d8] sm:$0xf]
    %v327 = vld [vmem:[%s1 + $0x3dc] sm:$0xf]
    %v328 = vld [vmem:[%s1 + $0x3e0] sm:$0xf]
    %v329 = vld [vmem:[%s1 + $0x3e4] sm:$0xf]
    %v330 = vld [vmem:[%s1 + $0x3e8] sm:$0xf]
    %v331 = vld [vmem:[%s1 + $0x3ec] sm:$0xf]
    %v332 = vld [vmem:[%s1 + $0x3f0] sm:$0xf]
    %v333 = vld [vmem:[%s1 + $0x3f4] sm:$0xf]
    %v334 = vld [vmem:[%s1 + $0x3f8] sm:$0xf]
    %v335 = vld [vmem:[%s1 + $0x3fc] sm:$0xf]
    %v336 = vld [vmem:[%s1 + $0x400] sm:$0xf]
    %v337 = vld [vmem:[%s1 + $0x404] sm:$0xf]
    %v338 = vld [vmem:[%s1 + $0x408] sm:$0xf]
    %v339 = vld [vmem:[%s1 + $0x40c] sm:$0xf]
    %v340 = vld [vmem:[%s1 + $0x410] sm:$0xf]
    %v341 = vld [vmem:[%s1 + $0x414] sm:$0xf]
    %v342 = vld [vmem:[%s1 + $0x418] sm:$0xf]
    %v343 = vld [vmem:[%s1 + $0x41c] sm:$0xf]
    %v344 = vld [vmem:[%s1 + $0x420] sm:$0xf]
    %v345 = vld [vmem:[%s1 + $0x424] sm:$0xf]
    %v346 = vld [vmem:[%s1 + $0x428] sm:$0xf]
    %v347 = vld [vmem:[%s1 + $0x42c] sm:$0xf]
    %v348 = vld [vmem:[%s1 + $0x430] sm:$0xf]
    %v349 = vld [vmem:[%s1 + $0x434] sm:$0xf]
    %v350 = vld [vmem:[%s1 + $0x438] sm:$0xf]
    %v351 = vld [vmem:[%s1 + $0x43c] sm:$0xf]
    %v352 = vld [vmem:[%s1 + $0x440] sm:$0xf]
    %v353 = vld [vmem:[%s1 + $0x444] sm:$0xf]
    %v354 = vld [vmem:[%s1 + $0x448] sm:$0xf]
    %v355 = vld [vmem:[%s1 + $0x44c] sm:$0xf]
    %v356 = vld [vmem:[%s1 + $0x450] sm:$0xf]
    %v357 = vld [vmem:[%s1 + $0x454] sm:$0xf]
    %v358 = vld [vmem:[%s1 + $0x458] sm:$0xf]
    %v359 = vld [vmem:[%s1 + $0x45c] sm:$0xf]
    %v360 = vld [vmem:[%s1 + $0x460] sm:$0xf]
    %v361 = vld [vmem:[%s1 + $0x464] sm:$0xf]
    %v362 = vld [vmem:[%s1 + $0x468] sm:$0xf]
    %v363 = vld [vmem:[%s1 + $0x46c] sm:$0xf]
    %v364 = vld [vmem:[%s1 + $0x470] sm:$0xf]
    %v365 = vld [vmem:[%s1 + $0x474] sm:$0xf]
    %v366 = vld [vmem:[%s1 + $0x478] sm:$0xf]
    %v367 = vld [vmem:[%s1 + $0x47c] sm:$0xf]
    %v368 = vld [vmem:[%s1 + $0x480] sm:$0xf]
    %v369 = vld [vmem:[%s1 + $0x484] sm:$0xf]
    %v370 = vld [vmem:[%s1 + $0x488] sm:$0xf]
    %v371 = vld [vmem:[%s1 + $0x48c] sm:$0xf]
    %v372 = vld [vmem:[%s1 + $0x490] sm:$0xf]
    %v373 = vld [vmem:[%s1 + $0x494] sm:$0xf]
    %v374 = vld [vmem:[%s1 + $0x498] sm:$0xf]
    %v375 = vld [vmem:[%s1 + $0x49c] sm:$0xf]
    %v376 = vld [vmem:[%s1 + $0x4a0] sm:$0xf]
    %v377 = vld [vmem:[%s1 + $0x4a4] sm:$0xf]
    %v378 = vld [vmem:[%s1 + $0x4a8] sm:$0xf]
    %v379 = vld [vmem:[%s1 + $0x4ac] sm:$0xf]
    %v380 = vld [vmem:[%s1 + $0x4b0] sm:$0xf]
    %v381 = vld [vmem:[%s1 + $0x4b4] sm:$0xf]
    %v382 = vld [vmem:[%s1 + $0x4b8] sm:$0xf]
    %v383 = vld [vmem:[%s1 + $0x4bc] sm:$0xf]
    %v384 = vld [vmem:[%s1 + $0x4c0] sm:$0xf]
    %v385 = vld [vmem:[%s1 + $0x4c4] sm:$0xf]
    %v386 = vld [vmem:[%s1 + $0x4c8] sm:$0xf]
    %v387 = vld [vmem:[%s1 + $0x4cc] sm:$0xf]
    %v388 = vld [vmem:[%s1 + $0x4d0] sm:$0xf]
    %v389 = vld [vmem:[%s1 + $0x4d4] sm:$0xf]
    %v390 = vld [vmem:[%s1 + $0x4d8] sm:$0xf]
    %v391 = vld [vmem:[%s1 + $0x4dc] sm:$0xf]
    %v392 = vld [vmem:[%s1 + $0x4e0] sm:$0xf]
    %v393 = vld [vmem:[%s1 + $0x4e4] sm:$0xf]
    %v394 = vld [vmem:[%s1 + $0x4e8] sm:$0xf]
    %v395 = vld [vmem:[%s1 + $0x4ec] sm:$0xf]
    %v396 = vld [vmem:[%s1 + $0x4f0] sm:$0xf]
    %v397 = vld [vmem:[%s1 + $0x4f4] sm:$0xf]
    %v398 = vld [vmem:[%s1 + $0x4f8] sm:$0xf]
    %v399 = vld [vmem:[%s1 + $0x4fc] sm:$0xf]
    %v400 = vld [vmem:[%s1 + $0x500] sm:$0xf]
    %v401 = vld [vmem:[%s1 + $0x504] sm:$0xf]
    %v402 = vld [vmem:[%s1 + $0x508] sm:$0xf]
    %v403 = vld [vmem:[%s1 + $0x50c] sm:$0xf]
    %v404 = vld [vmem:[%s1 + $0x510] sm:$0xf]
    %v405 = vld [vmem:[%s1 + $0x514] sm:$0xf]
    %v406 = vld [vmem:[%s1 + $0x518] sm:$0xf]
    %v407 = vld [vmem:[%s1 + $0x51c] sm:$0xf]
    %v408 = vld [vmem:[%s1 + $0x520] sm:$0xf]
    %v409 = vld [vmem:[%s1 + $0x524] sm:$0xf]
    %v410 = vld [vmem:[%s1 + $0x528] sm:$0xf]
    %v411 = vld [vmem:[%s1 + $0x52c] sm:$0xf]
    %v412 = vld [vmem:[%s1 + $0x530] sm:$0xf]
    %v413 = vld [vmem:[%s1 + $0x534] sm:$0xf]
    %v414 = vld [vmem:[%s1 + $0x538] sm:$0xf]
    %v415 = vld [vmem:[%s1 + $0x53c] sm:$0xf]
    %v416 = vld [vmem:[%s1 + $0x540] sm:$0xf]
    %v417 = vld [vmem:[%s1 + $0x544] sm:$0xf]
    %v418 = vld [vmem:[%s1 + $0x548] sm:$0xf]
    %v419 = vld [vmem:[%s1 + $0x54c] sm:$0xf]
    %v420 = vld [vmem:[%s1 + $0x550] sm:$0xf]
    %v421 = vld [vmem:[%s1 + $0x554] sm:$0xf]
    %v422 = vld [vmem:[%s1 + $0x558] sm:$0xf]
    %v423 = vld [vmem:[%s1 + $0x55c] sm:$0xf]
    %v424 = vld [vmem:[%s1 + $0x560] sm:$0xf]
    %v425 = vld [vmem:[%s1 + $0x564] sm:$0xf]
    %v426 = vld [vmem:[%s1 + $0x568] sm:$0xf]
    %v427 = vld [vmem:[%s1 + $0x56c] sm:$0xf]
    %v428 = vld [vmem:[%s1 + $0x570] sm:$0xf]
    %v429 = vld [vmem:[%s1 + $0x574] sm:$0xf]
    %v430 = vld [vmem:[%s1 + $0x578] sm:$0xf]
    %v431 = vld [vmem:[%s1 + $0x57c] sm:$0xf]
    %v432 = vld [vmem:[%s1 + $0x580] sm:$0xf]
    %v433 = vld [vmem:[%s1 + $0x584] sm:$0xf]
    %v434 = vld [vmem:[%s1 + $0x588] sm:$0xf]
    %v435 = vld [vmem:[%s1 + $0x58c] sm:$0xf]
    %v436 = vld [vmem:[%s1 + $0x590] sm:$0xf]
    %v437 = vld [vmem:[%s1 + $0x594] sm:$0xf]
    %v438 = vld [vmem:[%s1 + $0x598] sm:$0xf]
    %v439 = vld [vmem:[%s1 + $0x59c] sm:$0xf]
    %v440 = vld [vmem:[%s1 + $0x5a0] sm:$0xf]
    %v441 = vld [vmem:[%s1 + $0x5a4] sm:$0xf]
    %v442 = vld [vmem:[%s1 + $0x5a8] sm:$0xf]
    %v443 = vld [vmem:[%s1 + $0x5ac] sm:$0xf]
    %v444 = vld [vmem:[%s1 + $0x5b0] sm:$0xf]
    %v445 = vld [vmem:[%s1 + $0x5b4] sm:$0xf]
    %v446 = vld [vmem:[%s1 + $0x5b8] sm:$0xf]
    %v447 = vld [vmem:[%s1 + $0x5bc] sm:$0xf]
    %v448 = vld [vmem:[%s1 + $0x5c0] sm:$0xf]
    %v449 = vld [vmem:[%s1 + $0x5c4] sm:$0xf]
    %v450 = vld [vmem:[%s1 + $0x5c8] sm:$0xf]
    %v451 = vld [vmem:[%s1 + $0x5cc] sm:$0xf]
    %v452 = vld [vmem:[%s1 + $0x5d0] sm:$0xf]
    %v453 = vld [vmem:[%s1 + $0x5d4] sm:$0xf]
    %v454 = vld [vmem:[%s1 + $0x5d8] sm:$0xf]
    %v455 = vld [vmem:[%s1 + $0x5dc] sm:$0xf]
    %v456 = vld [vmem:[%s1 + $0x5e0] sm:$0xf]
    %v457 = vld [vmem:[%s1 + $0x5e4] sm:$0xf]
    %v458 = vld [vmem:[%s1 + $0x5e8] sm:$0xf]
    %v459 = vld [vmem:[%s1 + $0x5ec] sm:$0xf]
    %v460 = vld [vmem:[%s1 + $0x5f0] sm:$0xf]
    %v461 = vld [vmem:[%s1 + $0x5f4] sm:$0xf]
    %v462 = vld [vmem:[%s1 + $0x5f8] sm:$0xf]
    %v463 = vld [vmem:[%s1 + $0x5fc] sm:$0xf]
    %v464 = vld [vmem:[%s1 + $0x600] sm:$0xf]
    %v465 = vld [vmem:[%s1 + $0x604] sm:$0xf]
    %v466 = vld [vmem:[%s1 + $0x608] sm:$0xf]
    %v467 = vld [vmem:[%s1 + $0x60c] sm:$0xf]
    %v468 = vld [vmem:[%s1 + $0x610] sm:$0xf]
    %v469 = vld [vmem:[%s1 + $0x614] sm:$0xf]
    %v470 = vld [vmem:[%s1 + $0x618] sm:$0xf]
    %v471 = vld [vmem:[%s1 + $0x61c] sm:$0xf]
    %v472 = vld [vmem:[%s1 + $0x620] sm:$0xf]
    %v473 = vld [vmem:[%s1 + $0x624] sm:$0xf]
    %v474 = vld [vmem:[%s1 + $0x628] sm:$0xf]
    %v475 = vld [vmem:[%s1 + $0x62c] sm:$0xf]
    %v476 = vld [vmem:[%s1 + $0x630] sm:$0xf]
    %v477 = vld [vmem:[%s1 + $0x634] sm:$0xf]
    %v478 = vld [vmem:[%s1 + $0x638] sm:$0xf]
    %v479 = vld [vmem:[%s1 + $0x63c] sm:$0xf]
    %v480 = vld [vmem:[%s1 + $0x640] sm:$0xf]
    %v481 = vld [vmem:[%s1 + $0x644] sm:$0xf]
    %v482 = vld [vmem:[%s1 + $0x648] sm:$0xf]
    %v483 = vld [vmem:[%s1 + $0x64c] sm:$0xf]
    %v484 = vld [vmem:[%s1 + $0x650] sm:$0xf]
    %v485 = vld [vmem:[%s1 + $0x654] sm:$0xf]
    %v486 = vld [vmem:[%s1 + $0x658] sm:$0xf]
    %v487 = vld [vmem:[%s1 + $0x65c] sm:$0xf]
    %v488 = vld [vmem:[%s1 + $0x660] sm:$0xf]
    %v489 = vld [vmem:[%s1 + $0x664] sm:$0xf]
    %v490 = vld [vmem:[%s1 + $0x668] sm:$0xf]
    %v491 = vld [vmem:[%s1 + $0x66c] sm:$0xf]
    %v492 = vld [vmem:[%s1 + $0x670] sm:$0xf]
    %v493 = vld [vmem:[%s1 + $0x674] sm:$0xf]
    %v494 = vld [vmem:[%s1 + $0x678] sm:$0xf]
    %v495 = vld [vmem:[%s1 + $0x67c] sm:$0xf]
    %v496 = vld [vmem:[%s1 + $0x680] sm:$0xf]
    %v497 = vld [vmem:[%s1 + $0x684] sm:$0xf]
    %v498 = vld [vmem:[%s1 + $0x688] sm:$0xf]
    %v499 = vld [vmem:[%s1 + $0x68c] sm:$0xf]
    %v500 = vld [vmem:[%s1 + $0x690] sm:$0xf]
    %v501 = vld [vmem:[%s1 + $0x694] sm:$0xf]
    %v502 = vld [vmem:[%s1 + $0x698] sm:$0xf]
    %v503 = vld [vmem:[%s1 + $0x69c] sm:$0xf]
    %v504 = vld [vmem:[%s1 + $0x6a0] sm:$0xf]
    %v505 = vld [vmem:[%s1 + $0x6a4] sm:$0xf]
    %v506 = vld [vmem:[%s1 + $0x6a8] sm:$0xf]
    %v507 = vld [vmem:[%s1 + $0x6ac] sm:$0xf]
    %v508 = vld [vmem:[%s1 + $0x6b0] sm:$0xf]
    %v509 = vld [vmem:[%s1 + $0x6b4] sm:$0xf]
    %v510 = vld [vmem:[%s1 + $0x6b8] sm:$0xf]
    %v511 = vld [vmem:[%s1 + $0x6bc] sm:$0xf]
    %v512 = vld [vmem:[%s1 + $0x6c0] sm:$0xf]
    %v513 = vld [vmem:[%s1 + $0x6c4] sm:$0xf]
    %v514 = vld [vmem:[%s1 + $0x6c8] sm:$0xf]
    %v515 = vld [vmem:[%s1 + $0x6cc] sm:$0xf]
    %v516 = vld [vmem:[%s1 + $0x6d0] sm:$0xf]
    %v517 = vld [vmem:[%s1 + $0x6d4] sm:$0xf]
    %v518 = vld [vmem:[%s1 + $0x6d8] sm:$0xf]
    %v519 = vld [vmem:[%s1 + $0x6dc] sm:$0xf]
    %v520 = vld [vmem:[%s1 + $0x6e0] sm:$0xf]
    %v521 = vld [vmem:[%s1 + $0x6e4] sm:$0xf]
    %v522 = vld [vmem:[%s1 + $0x6e8] sm:$0xf]
    %v523 = vld [vmem:[%s1 + $0x6ec] sm:$0xf]
    %v524 = vld [vmem:[%s1 + $0x6f0] sm:$0xf]
    %v525 = vld [vmem:[%s1 + $0x6f4] sm:$0xf]
    %v526 = vld [vmem:[%s1 + $0x6f8] sm:$0xf]
    %v527 = vld [vmem:[%s1 + $0x6fc] sm:$0xf]
    %v528 = vld [vmem:[%s1 + $0x700] sm:$0xf]
    %v529 = vld [vmem:[%s1 + $0x704] sm:$0xf]
    %v530 = vld [vmem:[%s1 + $0x708] sm:$0xf]
    %v531 = vld [vmem:[%s1 + $0x70c] sm:$0xf]
    %v532 = vld [vmem:[%s1 + $0x710] sm:$0xf]
    %v533 = vld [vmem:[%s1 + $0x714] sm:$0xf]
    %v534 = vld [vmem:[%s1 + $0x718] sm:$0xf]
    %v535 = vld [vmem:[%s1 + $0x71c] sm:$0xf]
    %v536 = vld [vmem:[%s1 + $0x720] sm:$0xf]
    %v537 = vld [vmem:[%s1 + $0x724] sm:$0xf]
    %v538 = vld [vmem:[%s1 + $0x728] sm:$0xf]
    %v539 = vld [vmem:[%s1 + $0x72c] sm:$0xf]
    %v540 = vld [vmem:[%s1 + $0x730] sm:$0xf]
    %v541 = vld [vmem:[%s1 + $0x734] sm:$0xf]
    %v542 = vld [vmem:[%s1 + $0x738] sm:$0xf]
    %v543 = vld [vmem:[%s1 + $0x73c] sm:$0xf]
    %v544 = vld [vmem:[%s1 + $0x740] sm:$0xf]
    %v545 = vld [vmem:[%s1 + $0x744] sm:$0xf]
    %v546 = vld [vmem:[%s1 + $0x748] sm:$0xf]
    %v547 = vld [vmem:[%s1 + $0x74c] sm:$0xf]
    %v548 = vld [vmem:[%s1 + $0x750] sm:$0xf]
    %v549 = vld [vmem:[%s1 + $0x754] sm:$0xf]
    %v550 = vld [vmem:[%s1 + $0x758] sm:$0xf]
    %v551 = vld [vmem:[%s1 + $0x75c] sm:$0xf]
    %v552 = vld [vmem:[%s1 + $0x760] sm:$0xf]
    %v553 = vld [vmem:[%s1 + $0x764] sm:$0xf]
    %v554 = vld [vmem:[%s1 + $0x768] sm:$0xf]
    %v555 = vld [vmem:[%s1 + $0x76c] sm:$0xf]
    %v556 = vld [vmem:[%s1 + $0x770] sm:$0xf]
    %v557 = vld [vmem:[%s1 + $0x774] sm:$0xf]
    %v558 = vld [vmem:[%s1 + $0x778] sm:$0xf]
    %v559 = vld [vmem:[%s1 + $0x77c] sm:$0xf]
    %v560 = vld [vmem:[%s1 + $0x780] sm:$0xf]
    %v561 = vld [vmem:[%s1 + $0x784] sm:$0xf]
    %v562 = vld [vmem:[%s1 + $0x788] sm:$0xf]
    %v563 = vld [vmem:[%s1 + $0x78c] sm:$0xf]
    %v564 = vld [vmem:[%s1 + $0x790] sm:$0xf]
    %v565 = vld [vmem:[%s1 + $0x794] sm:$0xf]
    %v566 = vld [vmem:[%s1 + $0x798] sm:$0xf]
    %v567 = vld [vmem:[%s1 + $0x79c] sm:$0xf]
    %v568 = vld [vmem:[%s1 + $0x7a0] sm:$0xf]
    %v569 = vld [vmem:[%s1 + $0x7a4] sm:$0xf]
    %v570 = vld [vmem:[%s1 + $0x7a8] sm:$0xf]
    %v571 = vld [vmem:[%s1 + $0x7ac] sm:$0xf]
    %v572 = vld [vmem:[%s1 + $0x7b0] sm:$0xf]
    %v573 = vld [vmem:[%s1 + $0x7b4] sm:$0xf]
    %v574 = vld [vmem:[%s1 + $0x7b8] sm:$0xf]
    %v575 = vld [vmem:[%s1 + $0x7bc] sm:$0xf]
    %v576 = vld [vmem:[%s1 + $0x7c0] sm:$0xf]
    %v577 = vld [vmem:[%s1 + $0x7c4] sm:$0xf]
    %v578 = vld [vmem:[%s1 + $0x7c8] sm:$0xf]
    %v579 = vld [vmem:[%s1 + $0x7cc] sm:$0xf]
    %v580 = vld [vmem:[%s1 + $0x7d0] sm:$0xf]
    %v581 = vld [vmem:[%s1 + $0x7d4] sm:$0xf]
    %v582 = vld [vmem:[%s1 + $0x7d8] sm:$0xf]
    %v583 = vld [vmem:[%s1 + $0x7dc] sm:$0xf]
    %v584 = vld [vmem:[%s1 + $0x7e0] sm:$0xf]
    %v585 = vld [vmem:[%s1 + $0x7e4] sm:$0xf]
    %v586 = vld [vmem:[%s1 + $0x7e8] sm:$0xf]
    %v587 = vld [vmem:[%s1 + $0x7ec] sm:$0xf]
    %v588 = vld [vmem:[%s1 + $0x7f0] sm:$0xf]
    %v589 = vld [vmem:[%s1 + $0x7f4] sm:$0xf]
    %v590 = vld [vmem:[%s1 + $0x7f8] sm:$0xf]
    %v591 = vld [vmem:[%s1 + $0x7fc] sm:$0xf]
    %v592 = vld [vmem:[%s2] sm:$0x1]
    %v594 = vlaneseq
    %v595 = vshrl.u32 %v594, 7
    %v596 = vsub.s32 0, %v595
    %v597 = vrot.slane %v592, %v596
    %v1111 = vunpack.c.l.b16 %v80
    %v1112 = vunpack.c.l.b16 %v81
    %v1113 = vunpack.c.l.b16 %v82
    %v1114 = vunpack.c.l.b16 %v83
    %v1115 = vunpack.c.l.b16 %v84
    %v1116 = vunpack.c.l.b16 %v85
    %v1117 = vunpack.c.l.b16 %v86
    %v1118 = vunpack.c.l.b16 %v87
    %v1119 = vunpack.c.l.b16 %v88
    %v1120 = vunpack.c.l.b16 %v89
    %v1121 = vunpack.c.l.b16 %v90
    %v1122 = vunpack.c.l.b16 %v91
    %v1123 = vunpack.c.l.b16 %v92
    %v1124 = vunpack.c.l.b16 %v93
    %v1125 = vunpack.c.l.b16 %v94
    %v1126 = vunpack.c.l.b16 %v95
    %v1127 = vunpack.c.l.b16 %v96
    %v1128 = vunpack.c.l.b16 %v97
    %v1129 = vunpack.c.l.b16 %v98
    %v1130 = vunpack.c.l.b16 %v99
    %v1131 = vunpack.c.l.b16 %v100
    %v1132 = vunpack.c.l.b16 %v101
    %v1133 = vunpack.c.l.b16 %v102
    %v1134 = vunpack.c.l.b16 %v103
    %v1135 = vunpack.c.l.b16 %v104
    %v1136 = vunpack.c.l.b16 %v105
    %v1137 = vunpack.c.l.b16 %v106
    %v1138 = vunpack.c.l.b16 %v107
    %v1139 = vunpack.c.l.b16 %v108
    %v1140 = vunpack.c.l.b16 %v109
    %v1141 = vunpack.c.l.b16 %v110
    %v1142 = vunpack.c.l.b16 %v111
    %v1143 = vunpack.c.l.b16 %v112
    %v1144 = vunpack.c.l.b16 %v113
    %v1145 = vunpack.c.l.b16 %v114
    %v1146 = vunpack.c.l.b16 %v115
    %v1147 = vunpack.c.l.b16 %v116
    %v1148 = vunpack.c.l.b16 %v117
    %v1149 = vunpack.c.l.b16 %v118
    %v1150 = vunpack.c.l.b16 %v119
    %v1151 = vunpack.c.l.b16 %v120
    %v1152 = vunpack.c.l.b16 %v121
    %v1153 = vunpack.c.l.b16 %v122
    %v1154 = vunpack.c.l.b16 %v123
    %v1155 = vunpack.c.l.b16 %v124
    %v1156 = vunpack.c.l.b16 %v125
    %v1157 = vunpack.c.l.b16 %v126
    %v1158 = vunpack.c.l.b16 %v127
    %v1159 = vunpack.c.l.b16 %v128
    %v1160 = vunpack.c.l.b16 %v129
    %v1161 = vunpack.c.l.b16 %v130
    %v1162 = vunpack.c.l.b16 %v131
    %v1163 = vunpack.c.l.b16 %v132
    %v1164 = vunpack.c.l.b16 %v133
    %v1165 = vunpack.c.l.b16 %v134
    %v1166 = vunpack.c.l.b16 %v135
    %v1167 = vunpack.c.l.b16 %v136
    %v1168 = vunpack.c.l.b16 %v137
    %v1169 = vunpack.c.l.b16 %v138
    %v1170 = vunpack.c.l.b16 %v139
    %v1171 = vunpack.c.l.b16 %v140
    %v1172 = vunpack.c.l.b16 %v141
    %v1173 = vunpack.c.l.b16 %v142
    %v1174 = vunpack.c.l.b16 %v143
    %v1175 = vunpack.c.l.b16 %v144
    %v1176 = vunpack.c.l.b16 %v145
    %v1177 = vunpack.c.l.b16 %v146
    %v1178 = vunpack.c.l.b16 %v147
    %v1179 = vunpack.c.l.b16 %v148
    %v1180 = vunpack.c.l.b16 %v149
    %v1181 = vunpack.c.l.b16 %v150
    %v1182 = vunpack.c.l.b16 %v151
    %v1183 = vunpack.c.l.b16 %v152
    %v1184 = vunpack.c.l.b16 %v153
    %v1185 = vunpack.c.l.b16 %v154
    %v1186 = vunpack.c.l.b16 %v155
    %v1187 = vunpack.c.l.b16 %v156
    %v1188 = vunpack.c.l.b16 %v157
    %v1189 = vunpack.c.l.b16 %v158
    %v1190 = vunpack.c.l.b16 %v159
    %v1191 = vunpack.c.l.b16 %v160
    %v1192 = vunpack.c.l.b16 %v161
    %v1193 = vunpack.c.l.b16 %v162
    %v1194 = vunpack.c.l.b16 %v163
    %v1195 = vunpack.c.l.b16 %v164
    %v1196 = vunpack.c.l.b16 %v165
    %v1197 = vunpack.c.l.b16 %v166
    %v1198 = vunpack.c.l.b16 %v167
    %v1199 = vunpack.c.l.b16 %v168
    %v1200 = vunpack.c.l.b16 %v169
    %v1201 = vunpack.c.l.b16 %v170
    %v1202 = vunpack.c.l.b16 %v171
    %v1203 = vunpack.c.l.b16 %v172
    %v1204 = vunpack.c.l.b16 %v173
    %v1205 = vunpack.c.l.b16 %v174
    %v1206 = vunpack.c.l.b16 %v175
    %v1207 = vunpack.c.l.b16 %v176
    %v1208 = vunpack.c.l.b16 %v177
    %v1209 = vunpack.c.l.b16 %v178
    %v1210 = vunpack.c.l.b16 %v179
    %v1211 = vunpack.c.l.b16 %v180
    %v1212 = vunpack.c.l.b16 %v181
    %v1213 = vunpack.c.l.b16 %v182
    %v1214 = vunpack.c.l.b16 %v183
    %v1215 = vunpack.c.l.b16 %v184
    %v1216 = vunpack.c.l.b16 %v185
    %v1217 = vunpack.c.l.b16 %v186
    %v1218 = vunpack.c.l.b16 %v187
    %v1219 = vunpack.c.l.b16 %v188
    %v1220 = vunpack.c.l.b16 %v189
    %v1221 = vunpack.c.l.b16 %v190
    %v1222 = vunpack.c.l.b16 %v191
    %v1223 = vunpack.c.l.b16 %v192
    %v1224 = vunpack.c.l.b16 %v193
    %v1225 = vunpack.c.l.b16 %v194
    %v1226 = vunpack.c.l.b16 %v195
    %v1227 = vunpack.c.l.b16 %v196
    %v1228 = vunpack.c.l.b16 %v197
    %v1229 = vunpack.c.l.b16 %v198
    %v1230 = vunpack.c.l.b16 %v199
    %v1231 = vunpack.c.l.b16 %v200
    %v1232 = vunpack.c.l.b16 %v201
    %v1233 = vunpack.c.l.b16 %v202
    %v1234 = vunpack.c.l.b16 %v203
    %v1235 = vunpack.c.l.b16 %v204
    %v1236 = vunpack.c.l.b16 %v205
    %v1237 = vunpack.c.l.b16 %v206
    %v1238 = vunpack.c.l.b16 %v207
    %v1239 = vunpack.c.l.b16 %v208
    %v1240 = vunpack.c.l.b16 %v209
    %v1241 = vunpack.c.l.b16 %v210
    %v1242 = vunpack.c.l.b16 %v211
    %v1243 = vunpack.c.l.b16 %v212
    %v1244 = vunpack.c.l.b16 %v213
    %v1245 = vunpack.c.l.b16 %v214
    %v1246 = vunpack.c.l.b16 %v215
    %v1247 = vunpack.c.l.b16 %v216
    %v1248 = vunpack.c.l.b16 %v217
    %v1249 = vunpack.c.l.b16 %v218
    %v1250 = vunpack.c.l.b16 %v219
    %v1251 = vunpack.c.l.b16 %v220
    %v1252 = vunpack.c.l.b16 %v221
    %v1253 = vunpack.c.l.b16 %v222
    %v1254 = vunpack.c.l.b16 %v223
    %v1255 = vunpack.c.l.b16 %v224
    %v1256 = vunpack.c.l.b16 %v225
    %v1257 = vunpack.c.l.b16 %v226
    %v1258 = vunpack.c.l.b16 %v227
    %v1259 = vunpack.c.l.b16 %v228
    %v1260 = vunpack.c.l.b16 %v229
    %v1261 = vunpack.c.l.b16 %v230
    %v1262 = vunpack.c.l.b16 %v231
    %v1263 = vunpack.c.l.b16 %v232
    %v1264 = vunpack.c.l.b16 %v233
    %v1265 = vunpack.c.l.b16 %v234
    %v1266 = vunpack.c.l.b16 %v235
    %v1267 = vunpack.c.l.b16 %v236
    %v1268 = vunpack.c.l.b16 %v237
    %v1269 = vunpack.c.l.b16 %v238
    %v1270 = vunpack.c.l.b16 %v239
    %v1271 = vunpack.c.l.b16 %v240
    %v1272 = vunpack.c.l.b16 %v241
    %v1273 = vunpack.c.l.b16 %v242
    %v1274 = vunpack.c.l.b16 %v243
    %v1275 = vunpack.c.l.b16 %v244
    %v1276 = vunpack.c.l.b16 %v245
    %v1277 = vunpack.c.l.b16 %v246
    %v1278 = vunpack.c.l.b16 %v247
    %v1279 = vunpack.c.l.b16 %v248
    %v1280 = vunpack.c.l.b16 %v249
    %v1281 = vunpack.c.l.b16 %v250
    %v1282 = vunpack.c.l.b16 %v251
    %v1283 = vunpack.c.l.b16 %v252
    %v1284 = vunpack.c.l.b16 %v253
    %v1285 = vunpack.c.l.b16 %v254
    %v1286 = vunpack.c.l.b16 %v255
    %v1287 = vunpack.c.l.b16 %v256
    %v1288 = vunpack.c.l.b16 %v257
    %v1289 = vunpack.c.l.b16 %v258
    %v1290 = vunpack.c.l.b16 %v259
    %v1291 = vunpack.c.l.b16 %v260
    %v1292 = vunpack.c.l.b16 %v261
    %v1293 = vunpack.c.l.b16 %v262
    %v1294 = vunpack.c.l.b16 %v263
    %v1295 = vunpack.c.l.b16 %v264
    %v1296 = vunpack.c.l.b16 %v265
    %v1297 = vunpack.c.l.b16 %v266
    %v1298 = vunpack.c.l.b16 %v267
    %v1299 = vunpack.c.l.b16 %v268
    %v1300 = vunpack.c.l.b16 %v269
    %v1301 = vunpack.c.l.b16 %v270
    %v1302 = vunpack.c.l.b16 %v271
    %v1303 = vunpack.c.l.b16 %v272
    %v1304 = vunpack.c.l.b16 %v273
    %v1305 = vunpack.c.l.b16 %v274
    %v1306 = vunpack.c.l.b16 %v275
    %v1307 = vunpack.c.l.b16 %v276
    %v1308 = vunpack.c.l.b16 %v277
    %v1309 = vunpack.c.l.b16 %v278
    %v1310 = vunpack.c.l.b16 %v279
    %v1311 = vunpack.c.l.b16 %v280
    %v1312 = vunpack.c.l.b16 %v281
    %v1313 = vunpack.c.l.b16 %v282
    %v1314 = vunpack.c.l.b16 %v283
    %v1315 = vunpack.c.l.b16 %v284
    %v1316 = vunpack.c.l.b16 %v285
    %v1317 = vunpack.c.l.b16 %v286
    %v1318 = vunpack.c.l.b16 %v287
    %v1319 = vunpack.c.l.b16 %v288
    %v1320 = vunpack.c.l.b16 %v289
    %v1321 = vunpack.c.l.b16 %v290
    %v1322 = vunpack.c.l.b16 %v291
    %v1323 = vunpack.c.l.b16 %v292
    %v1324 = vunpack.c.l.b16 %v293
    %v1325 = vunpack.c.l.b16 %v294
    %v1326 = vunpack.c.l.b16 %v295
    %v1327 = vunpack.c.l.b16 %v296
    %v1328 = vunpack.c.l.b16 %v297
    %v1329 = vunpack.c.l.b16 %v298
    %v1330 = vunpack.c.l.b16 %v299
    %v1331 = vunpack.c.l.b16 %v300
    %v1332 = vunpack.c.l.b16 %v301
    %v1333 = vunpack.c.l.b16 %v302
    %v1334 = vunpack.c.l.b16 %v303
    %v1335 = vunpack.c.l.b16 %v304
    %v1336 = vunpack.c.l.b16 %v305
    %v1337 = vunpack.c.l.b16 %v306
    %v1338 = vunpack.c.l.b16 %v307
    %v1339 = vunpack.c.l.b16 %v308
    %v1340 = vunpack.c.l.b16 %v309
    %v1341 = vunpack.c.l.b16 %v310
    %v1342 = vunpack.c.l.b16 %v311
    %v1343 = vunpack.c.l.b16 %v312
    %v1344 = vunpack.c.l.b16 %v313
    %v1345 = vunpack.c.l.b16 %v314
    %v1346 = vunpack.c.l.b16 %v315
    %v1347 = vunpack.c.l.b16 %v316
    %v1348 = vunpack.c.l.b16 %v317
    %v1349 = vunpack.c.l.b16 %v318
    %v1350 = vunpack.c.l.b16 %v319
    %v1351 = vunpack.c.l.b16 %v320
    %v1352 = vunpack.c.l.b16 %v321
    %v1353 = vunpack.c.l.b16 %v322
    %v1354 = vunpack.c.l.b16 %v323
    %v1355 = vunpack.c.l.b16 %v324
    %v1356 = vunpack.c.l.b16 %v325
    %v1357 = vunpack.c.l.b16 %v326
    %v1358 = vunpack.c.l.b16 %v327
    %v1359 = vunpack.c.l.b16 %v328
    %v1360 = vunpack.c.l.b16 %v329
    %v1361 = vunpack.c.l.b16 %v330
    %v1362 = vunpack.c.l.b16 %v331
    %v1363 = vunpack.c.l.b16 %v332
    %v1364 = vunpack.c.l.b16 %v333
    %v1365 = vunpack.c.l.b16 %v334
    %v1366 = vunpack.c.l.b16 %v335
    %v1367 = vunpack.c.l.b16 %v336
    %v1368 = vunpack.c.l.b16 %v337
    %v1369 = vunpack.c.l.b16 %v338
    %v1370 = vunpack.c.l.b16 %v339
    %v1371 = vunpack.c.l.b16 %v340
    %v1372 = vunpack.c.l.b16 %v341
    %v1373 = vunpack.c.l.b16 %v342
    %v1374 = vunpack.c.l.b16 %v343
    %v1375 = vunpack.c.l.b16 %v344
    %v1376 = vunpack.c.l.b16 %v345
    %v1377 = vunpack.c.l.b16 %v346
    %v1378 = vunpack.c.l.b16 %v347
    %v1379 = vunpack.c.l.b16 %v348
    %v1380 = vunpack.c.l.b16 %v349
    %v1381 = vunpack.c.l.b16 %v350
    %v1382 = vunpack.c.l.b16 %v351
    %v1383 = vunpack.c.l.b16 %v352
    %v1384 = vunpack.c.l.b16 %v353
    %v1385 = vunpack.c.l.b16 %v354
    %v1386 = vunpack.c.l.b16 %v355
    %v1387 = vunpack.c.l.b16 %v356
    %v1388 = vunpack.c.l.b16 %v357
    %v1389 = vunpack.c.l.b16 %v358
    %v1390 = vunpack.c.l.b16 %v359
    %v1391 = vunpack.c.l.b16 %v360
    %v1392 = vunpack.c.l.b16 %v361
    %v1393 = vunpack.c.l.b16 %v362
    %v1394 = vunpack.c.l.b16 %v363
    %v1395 = vunpack.c.l.b16 %v364
    %v1396 = vunpack.c.l.b16 %v365
    %v1397 = vunpack.c.l.b16 %v366
    %v1398 = vunpack.c.l.b16 %v367
    %v1399 = vunpack.c.l.b16 %v368
    %v1400 = vunpack.c.l.b16 %v369
    %v1401 = vunpack.c.l.b16 %v370
    %v1402 = vunpack.c.l.b16 %v371
    %v1403 = vunpack.c.l.b16 %v372
    %v1404 = vunpack.c.l.b16 %v373
    %v1405 = vunpack.c.l.b16 %v374
    %v1406 = vunpack.c.l.b16 %v375
    %v1407 = vunpack.c.l.b16 %v376
    %v1408 = vunpack.c.l.b16 %v377
    %v1409 = vunpack.c.l.b16 %v378
    %v1410 = vunpack.c.l.b16 %v379
    %v1411 = vunpack.c.l.b16 %v380
    %v1412 = vunpack.c.l.b16 %v381
    %v1413 = vunpack.c.l.b16 %v382
    %v1414 = vunpack.c.l.b16 %v383
    %v1415 = vunpack.c.l.b16 %v384
    %v1416 = vunpack.c.l.b16 %v385
    %v1417 = vunpack.c.l.b16 %v386
    %v1418 = vunpack.c.l.b16 %v387
    %v1419 = vunpack.c.l.b16 %v388
    %v1420 = vunpack.c.l.b16 %v389
    %v1421 = vunpack.c.l.b16 %v390
    %v1422 = vunpack.c.l.b16 %v391
    %v1423 = vunpack.c.l.b16 %v392
    %v1424 = vunpack.c.l.b16 %v393
    %v1425 = vunpack.c.l.b16 %v394
    %v1426 = vunpack.c.l.b16 %v395
    %v1427 = vunpack.c.l.b16 %v396
    %v1428 = vunpack.c.l.b16 %v397
    %v1429 = vunpack.c.l.b16 %v398
    %v1430 = vunpack.c.l.b16 %v399
    %v1431 = vunpack.c.l.b16 %v400
    %v1432 = vunpack.c.l.b16 %v401
    %v1433 = vunpack.c.l.b16 %v402
    %v1434 = vunpack.c.l.b16 %v403
    %v1435 = vunpack.c.l.b16 %v404
    %v1436 = vunpack.c.l.b16 %v405
    %v1437 = vunpack.c.l.b16 %v406
    %v1438 = vunpack.c.l.b16 %v407
    %v1439 = vunpack.c.l.b16 %v408
    %v1440 = vunpack.c.l.b16 %v409
    %v1441 = vunpack.c.l.b16 %v410
    %v1442 = vunpack.c.l.b16 %v411
    %v1443 = vunpack.c.l.b16 %v412
    %v1444 = vunpack.c.l.b16 %v413
    %v1445 = vunpack.c.l.b16 %v414
    %v1446 = vunpack.c.l.b16 %v415
    %v1447 = vunpack.c.l.b16 %v416
    %v1448 = vunpack.c.l.b16 %v417
    %v1449 = vunpack.c.l.b16 %v418
    %v1450 = vunpack.c.l.b16 %v419
    %v1451 = vunpack.c.l.b16 %v420
    %v1452 = vunpack.c.l.b16 %v421
    %v1453 = vunpack.c.l.b16 %v422
    %v1454 = vunpack.c.l.b16 %v423
    %v1455 = vunpack.c.l.b16 %v424
    %v1456 = vunpack.c.l.b16 %v425
    %v1457 = vunpack.c.l.b16 %v426
    %v1458 = vunpack.c.l.b16 %v427
    %v1459 = vunpack.c.l.b16 %v428
    %v1460 = vunpack.c.l.b16 %v429
    %v1461 = vunpack.c.l.b16 %v430
    %v1462 = vunpack.c.l.b16 %v431
    %v1463 = vunpack.c.l.b16 %v432
    %v1464 = vunpack.c.l.b16 %v433
    %v1465 = vunpack.c.l.b16 %v434
    %v1466 = vunpack.c.l.b16 %v435
    %v1467 = vunpack.c.l.b16 %v436
    %v1468 = vunpack.c.l.b16 %v437
    %v1469 = vunpack.c.l.b16 %v438
    %v1470 = vunpack.c.l.b16 %v439
    %v1471 = vunpack.c.l.b16 %v440
    %v1472 = vunpack.c.l.b16 %v441
    %v1473 = vunpack.c.l.b16 %v442
    %v1474 = vunpack.c.l.b16 %v443
    %v1475 = vunpack.c.l.b16 %v444
    %v1476 = vunpack.c.l.b16 %v445
    %v1477 = vunpack.c.l.b16 %v446
    %v1478 = vunpack.c.l.b16 %v447
    %v1479 = vunpack.c.l.b16 %v448
    %v1480 = vunpack.c.l.b16 %v449
    %v1481 = vunpack.c.l.b16 %v450
    %v1482 = vunpack.c.l.b16 %v451
    %v1483 = vunpack.c.l.b16 %v452
    %v1484 = vunpack.c.l.b16 %v453
    %v1485 = vunpack.c.l.b16 %v454
    %v1486 = vunpack.c.l.b16 %v455
    %v1487 = vunpack.c.l.b16 %v456
    %v1488 = vunpack.c.l.b16 %v457
    %v1489 = vunpack.c.l.b16 %v458
    %v1490 = vunpack.c.l.b16 %v459
    %v1491 = vunpack.c.l.b16 %v460
    %v1492 = vunpack.c.l.b16 %v461
    %v1493 = vunpack.c.l.b16 %v462
    %v1494 = vunpack.c.l.b16 %v463
    %v1495 = vunpack.c.l.b16 %v464
    %v1496 = vunpack.c.l.b16 %v465
    %v1497 = vunpack.c.l.b16 %v466
    %v1498 = vunpack.c.l.b16 %v467
    %v1499 = vunpack.c.l.b16 %v468
    %v1500 = vunpack.c.l.b16 %v469
    %v1501 = vunpack.c.l.b16 %v470
    %v1502 = vunpack.c.l.b16 %v471
    %v1503 = vunpack.c.l.b16 %v472
    %v1504 = vunpack.c.l.b16 %v473
    %v1505 = vunpack.c.l.b16 %v474
    %v1506 = vunpack.c.l.b16 %v475
    %v1507 = vunpack.c.l.b16 %v476
    %v1508 = vunpack.c.l.b16 %v477
    %v1509 = vunpack.c.l.b16 %v478
    %v1510 = vunpack.c.l.b16 %v479
    %v1511 = vunpack.c.l.b16 %v480
    %v1512 = vunpack.c.l.b16 %v481
    %v1513 = vunpack.c.l.b16 %v482
    %v1514 = vunpack.c.l.b16 %v483
    %v1515 = vunpack.c.l.b16 %v484
    %v1516 = vunpack.c.l.b16 %v485
    %v1517 = vunpack.c.l.b16 %v486
    %v1518 = vunpack.c.l.b16 %v487
    %v1519 = vunpack.c.l.b16 %v488
    %v1520 = vunpack.c.l.b16 %v489
    %v1521 = vunpack.c.l.b16 %v490
    %v1522 = vunpack.c.l.b16 %v491
    %v1523 = vunpack.c.l.b16 %v492
    %v1524 = vunpack.c.l.b16 %v493
    %v1525 = vunpack.c.l.b16 %v494
    %v1526 = vunpack.c.l.b16 %v495
    %v1527 = vunpack.c.l.b16 %v496
    %v1528 = vunpack.c.l.b16 %v497
    %v1529 = vunpack.c.l.b16 %v498
    %v1530 = vunpack.c.l.b16 %v499
    %v1531 = vunpack.c.l.b16 %v500
    %v1532 = vunpack.c.l.b16 %v501
    %v1533 = vunpack.c.l.b16 %v502
    %v1534 = vunpack.c.l.b16 %v503
    %v1535 = vunpack.c.l.b16 %v504
    %v1536 = vunpack.c.l.b16 %v505
    %v1537 = vunpack.c.l.b16 %v506
    %v1538 = vunpack.c.l.b16 %v507
    %v1539 = vunpack.c.l.b16 %v508
    %v1540 = vunpack.c.l.b16 %v509
    %v1541 = vunpack.c.l.b16 %v510
    %v1542 = vunpack.c.l.b16 %v511
    %v1543 = vunpack.c.l.b16 %v512
    %v1544 = vunpack.c.l.b16 %v513
    %v1545 = vunpack.c.l.b16 %v514
    %v1546 = vunpack.c.l.b16 %v515
    %v1547 = vunpack.c.l.b16 %v516
    %v1548 = vunpack.c.l.b16 %v517
    %v1549 = vunpack.c.l.b16 %v518
    %v1550 = vunpack.c.l.b16 %v519
    %v1551 = vunpack.c.l.b16 %v520
    %v1552 = vunpack.c.l.b16 %v521
    %v1553 = vunpack.c.l.b16 %v522
    %v1554 = vunpack.c.l.b16 %v523
    %v1555 = vunpack.c.l.b16 %v524
    %v1556 = vunpack.c.l.b16 %v525
    %v1557 = vunpack.c.l.b16 %v526
    %v1558 = vunpack.c.l.b16 %v527
    %v1559 = vunpack.c.l.b16 %v528
    %v1560 = vunpack.c.l.b16 %v529
    %v1561 = vunpack.c.l.b16 %v530
    %v1562 = vunpack.c.l.b16 %v531
    %v1563 = vunpack.c.l.b16 %v532
    %v1564 = vunpack.c.l.b16 %v533
    %v1565 = vunpack.c.l.b16 %v534
    %v1566 = vunpack.c.l.b16 %v535
    %v1567 = vunpack.c.l.b16 %v536
    %v1568 = vunpack.c.l.b16 %v537
    %v1569 = vunpack.c.l.b16 %v538
    %v1570 = vunpack.c.l.b16 %v539
    %v1571 = vunpack.c.l.b16 %v540
    %v1572 = vunpack.c.l.b16 %v541
    %v1573 = vunpack.c.l.b16 %v542
    %v1574 = vunpack.c.l.b16 %v543
    %v1575 = vunpack.c.l.b16 %v544
    %v1576 = vunpack.c.l.b16 %v545
    %v1577 = vunpack.c.l.b16 %v546
    %v1578 = vunpack.c.l.b16 %v547
    %v1579 = vunpack.c.l.b16 %v548
    %v1580 = vunpack.c.l.b16 %v549
    %v1581 = vunpack.c.l.b16 %v550
    %v1582 = vunpack.c.l.b16 %v551
    %v1583 = vunpack.c.l.b16 %v552
    %v1584 = vunpack.c.l.b16 %v553
    %v1585 = vunpack.c.l.b16 %v554
    %v1586 = vunpack.c.l.b16 %v555
    %v1587 = vunpack.c.l.b16 %v556
    %v1588 = vunpack.c.l.b16 %v557
    %v1589 = vunpack.c.l.b16 %v558
    %v1590 = vunpack.c.l.b16 %v559
    %v1591 = vunpack.c.l.b16 %v560
    %v1592 = vunpack.c.l.b16 %v561
    %v1593 = vunpack.c.l.b16 %v562
    %v1594 = vunpack.c.l.b16 %v563
    %v1595 = vunpack.c.l.b16 %v564
    %v1596 = vunpack.c.l.b16 %v565
    %v1597 = vunpack.c.l.b16 %v566
    %v1598 = vunpack.c.l.b16 %v567
    %v1599 = vunpack.c.l.b16 %v568
    %v1600 = vunpack.c.l.b16 %v569
    %v1601 = vunpack.c.l.b16 %v570
    %v1602 = vunpack.c.l.b16 %v571
    %v1603 = vunpack.c.l.b16 %v572
    %v1604 = vunpack.c.l.b16 %v573
    %v1605 = vunpack.c.l.b16 %v574
    %v1606 = vunpack.c.l.b16 %v575
    %v1607 = vunpack.c.l.b16 %v576
    %v1608 = vunpack.c.l.b16 %v577
    %v1609 = vunpack.c.l.b16 %v578
    %v1610 = vunpack.c.l.b16 %v579
    %v1611 = vunpack.c.l.b16 %v580
    %v1612 = vunpack.c.l.b16 %v581
    %v1613 = vunpack.c.l.b16 %v582
    %v1614 = vunpack.c.l.b16 %v583
    %v1615 = vunpack.c.l.b16 %v584
    %v1616 = vunpack.c.l.b16 %v585
    %v1617 = vunpack.c.l.b16 %v586
    %v1618 = vunpack.c.l.b16 %v587
    %v1619 = vunpack.c.l.b16 %v588
    %v1620 = vunpack.c.l.b16 %v589
    %v1621 = vunpack.c.l.b16 %v590
    %v1622 = vunpack.c.l.b16 %v591
    %v1623 = vpack.c.b16 %v1112, %v1111
    %v1624 = vpack.c.b16 %v1114, %v1113
    %v1625 = vpack.c.b16 %v1116, %v1115
    %v1626 = vpack.c.b16 %v1118, %v1117
    %v1627 = vpack.c.b16 %v1120, %v1119
    %v1628 = vpack.c.b16 %v1122, %v1121
    %v1629 = vpack.c.b16 %v1124, %v1123
    %v1630 = vpack.c.b16 %v1126, %v1125
    %v1631 = vpack.c.b16 %v1128, %v1127
    %v1632 = vpack.c.b16 %v1130, %v1129
    %v1633 = vpack.c.b16 %v1132, %v1131
    %v1634 = vpack.c.b16 %v1134, %v1133
    %v1635 = vpack.c.b16 %v1136, %v1135
    %v1636 = vpack.c.b16 %v1138, %v1137
    %v1637 = vpack.c.b16 %v1140, %v1139
    %v1638 = vpack.c.b16 %v1142, %v1141
    %v1639 = vpack.c.b16 %v1144, %v1143
    %v1640 = vpack.c.b16 %v1146, %v1145
    %v1641 = vpack.c.b16 %v1148, %v1147
    %v1642 = vpack.c.b16 %v1150, %v1149
    %v1643 = vpack.c.b16 %v1152, %v1151
    %v1644 = vpack.c.b16 %v1154, %v1153
    %v1645 = vpack.c.b16 %v1156, %v1155
    %v1646 = vpack.c.b16 %v1158, %v1157
    %v1647 = vpack.c.b16 %v1160, %v1159
    %v1648 = vpack.c.b16 %v1162, %v1161
    %v1649 = vpack.c.b16 %v1164, %v1163
    %v1650 = vpack.c.b16 %v1166, %v1165
    %v1651 = vpack.c.b16 %v1168, %v1167
    %v1652 = vpack.c.b16 %v1170, %v1169
    %v1653 = vpack.c.b16 %v1172, %v1171
    %v1654 = vpack.c.b16 %v1174, %v1173
    %v1655 = vpack.c.b16 %v1176, %v1175
    %v1656 = vpack.c.b16 %v1178, %v1177
    %v1657 = vpack.c.b16 %v1180, %v1179
    %v1658 = vpack.c.b16 %v1182, %v1181
    %v1659 = vpack.c.b16 %v1184, %v1183
    %v1660 = vpack.c.b16 %v1186, %v1185
    %v1661 = vpack.c.b16 %v1188, %v1187
    %v1662 = vpack.c.b16 %v1190, %v1189
    %v1663 = vpack.c.b16 %v1192, %v1191
    %v1664 = vpack.c.b16 %v1194, %v1193
    %v1665 = vpack.c.b16 %v1196, %v1195
    %v1666 = vpack.c.b16 %v1198, %v1197
    %v1667 = vpack.c.b16 %v1200, %v1199
    %v1668 = vpack.c.b16 %v1202, %v1201
    %v1669 = vpack.c.b16 %v1204, %v1203
    %v1670 = vpack.c.b16 %v1206, %v1205
    %v1671 = vpack.c.b16 %v1208, %v1207
    %v1672 = vpack.c.b16 %v1210, %v1209
    %v1673 = vpack.c.b16 %v1212, %v1211
    %v1674 = vpack.c.b16 %v1214, %v1213
    %v1675 = vpack.c.b16 %v1216, %v1215
    %v1676 = vpack.c.b16 %v1218, %v1217
    %v1677 = vpack.c.b16 %v1220, %v1219
    %v1678 = vpack.c.b16 %v1222, %v1221
    %v1679 = vpack.c.b16 %v1224, %v1223
    %v1680 = vpack.c.b16 %v1226, %v1225
    %v1681 = vpack.c.b16 %v1228, %v1227
    %v1682 = vpack.c.b16 %v1230, %v1229
    %v1683 = vpack.c.b16 %v1232, %v1231
    %v1684 = vpack.c.b16 %v1234, %v1233
    %v1685 = vpack.c.b16 %v1236, %v1235
    %v1686 = vpack.c.b16 %v1238, %v1237
    %v1687 = vpack.c.b16 %v1240, %v1239
    %v1688 = vpack.c.b16 %v1242, %v1241
    %v1689 = vpack.c.b16 %v1244, %v1243
    %v1690 = vpack.c.b16 %v1246, %v1245
    %v1691 = vpack.c.b16 %v1248, %v1247
    %v1692 = vpack.c.b16 %v1250, %v1249
    %v1693 = vpack.c.b16 %v1252, %v1251
    %v1694 = vpack.c.b16 %v1254, %v1253
    %v1695 = vpack.c.b16 %v1256, %v1255
    %v1696 = vpack.c.b16 %v1258, %v1257
    %v1697 = vpack.c.b16 %v1260, %v1259
    %v1698 = vpack.c.b16 %v1262, %v1261
    %v1699 = vpack.c.b16 %v1264, %v1263
    %v1700 = vpack.c.b16 %v1266, %v1265
    %v1701 = vpack.c.b16 %v1268, %v1267
    %v1702 = vpack.c.b16 %v1270, %v1269
    %v1703 = vpack.c.b16 %v1272, %v1271
    %v1704 = vpack.c.b16 %v1274, %v1273
    %v1705 = vpack.c.b16 %v1276, %v1275
    %v1706 = vpack.c.b16 %v1278, %v1277
    %v1707 = vpack.c.b16 %v1280, %v1279
    %v1708 = vpack.c.b16 %v1282, %v1281
    %v1709 = vpack.c.b16 %v1284, %v1283
    %v1710 = vpack.c.b16 %v1286, %v1285
    %v1711 = vpack.c.b16 %v1288, %v1287
    %v1712 = vpack.c.b16 %v1290, %v1289
    %v1713 = vpack.c.b16 %v1292, %v1291
    %v1714 = vpack.c.b16 %v1294, %v1293
    %v1715 = vpack.c.b16 %v1296, %v1295
    %v1716 = vpack.c.b16 %v1298, %v1297
    %v1717 = vpack.c.b16 %v1300, %v1299
    %v1718 = vpack.c.b16 %v1302, %v1301
    %v1719 = vpack.c.b16 %v1304, %v1303
    %v1720 = vpack.c.b16 %v1306, %v1305
    %v1721 = vpack.c.b16 %v1308, %v1307
    %v1722 = vpack.c.b16 %v1310, %v1309
    %v1723 = vpack.c.b16 %v1312, %v1311
    %v1724 = vpack.c.b16 %v1314, %v1313
    %v1725 = vpack.c.b16 %v1316, %v1315
    %v1726 = vpack.c.b16 %v1318, %v1317
    %v1727 = vpack.c.b16 %v1320, %v1319
    %v1728 = vpack.c.b16 %v1322, %v1321
    %v1729 = vpack.c.b16 %v1324, %v1323
    %v1730 = vpack.c.b16 %v1326, %v1325
    %v1731 = vpack.c.b16 %v1328, %v1327
    %v1732 = vpack.c.b16 %v1330, %v1329
    %v1733 = vpack.c.b16 %v1332, %v1331
    %v1734 = vpack.c.b16 %v1334, %v1333
    %v1735 = vpack.c.b16 %v1336, %v1335
    %v1736 = vpack.c.b16 %v1338, %v1337
    %v1737 = vpack.c.b16 %v1340, %v1339
    %v1738 = vpack.c.b16 %v1342, %v1341
    %v1739 = vpack.c.b16 %v1344, %v1343
    %v1740 = vpack.c.b16 %v1346, %v1345
    %v1741 = vpack.c.b16 %v1348, %v1347
    %v1742 = vpack.c.b16 %v1350, %v1349
    %v1743 = vpack.c.b16 %v1352, %v1351
    %v1744 = vpack.c.b16 %v1354, %v1353
    %v1745 = vpack.c.b16 %v1356, %v1355
    %v1746 = vpack.c.b16 %v1358, %v1357
    %v1747 = vpack.c.b16 %v1360, %v1359
    %v1748 = vpack.c.b16 %v1362, %v1361
    %v1749 = vpack.c.b16 %v1364, %v1363
    %v1750 = vpack.c.b16 %v1366, %v1365
    %v1751 = vpack.c.b16 %v1368, %v1367
    %v1752 = vpack.c.b16 %v1370, %v1369
    %v1753 = vpack.c.b16 %v1372, %v1371
    %v1754 = vpack.c.b16 %v1374, %v1373
    %v1755 = vpack.c.b16 %v1376, %v1375
    %v1756 = vpack.c.b16 %v1378, %v1377
    %v1757 = vpack.c.b16 %v1380, %v1379
    %v1758 = vpack.c.b16 %v1382, %v1381
    %v1759 = vpack.c.b16 %v1384, %v1383
    %v1760 = vpack.c.b16 %v1386, %v1385
    %v1761 = vpack.c.b16 %v1388, %v1387
    %v1762 = vpack.c.b16 %v1390, %v1389
    %v1763 = vpack.c.b16 %v1392, %v1391
    %v1764 = vpack.c.b16 %v1394, %v1393
    %v1765 = vpack.c.b16 %v1396, %v1395
    %v1766 = vpack.c.b16 %v1398, %v1397
    %v1767 = vpack.c.b16 %v1400, %v1399
    %v1768 = vpack.c.b16 %v1402, %v1401
    %v1769 = vpack.c.b16 %v1404, %v1403
    %v1770 = vpack.c.b16 %v1406, %v1405
    %v1771 = vpack.c.b16 %v1408, %v1407
    %v1772 = vpack.c.b16 %v1410, %v1409
    %v1773 = vpack.c.b16 %v1412, %v1411
    %v1774 = vpack.c.b16 %v1414, %v1413
    %v1775 = vpack.c.b16 %v1416, %v1415
    %v1776 = vpack.c.b16 %v1418, %v1417
    %v1777 = vpack.c.b16 %v1420, %v1419
    %v1778 = vpack.c.b16 %v1422, %v1421
    %v1779 = vpack.c.b16 %v1424, %v1423
    %v1780 = vpack.c.b16 %v1426, %v1425
    %v1781 = vpack.c.b16 %v1428, %v1427
    %v1782 = vpack.c.b16 %v1430, %v1429
    %v1783 = vpack.c.b16 %v1432, %v1431
    %v1784 = vpack.c.b16 %v1434, %v1433
    %v1785 = vpack.c.b16 %v1436, %v1435
    %v1786 = vpack.c.b16 %v1438, %v1437
    %v1787 = vpack.c.b16 %v1440, %v1439
    %v1788 = vpack.c.b16 %v1442, %v1441
    %v1789 = vpack.c.b16 %v1444, %v1443
    %v1790 = vpack.c.b16 %v1446, %v1445
    %v1791 = vpack.c.b16 %v1448, %v1447
    %v1792 = vpack.c.b16 %v1450, %v1449
    %v1793 = vpack.c.b16 %v1452, %v1451
    %v1794 = vpack.c.b16 %v1454, %v1453
    %v1795 = vpack.c.b16 %v1456, %v1455
    %v1796 = vpack.c.b16 %v1458, %v1457
    %v1797 = vpack.c.b16 %v1460, %v1459
    %v1798 = vpack.c.b16 %v1462, %v1461
    %v1799 = vpack.c.b16 %v1464, %v1463
    %v1800 = vpack.c.b16 %v1466, %v1465
    %v1801 = vpack.c.b16 %v1468, %v1467
    %v1802 = vpack.c.b16 %v1470, %v1469
    %v1803 = vpack.c.b16 %v1472, %v1471
    %v1804 = vpack.c.b16 %v1474, %v1473
    %v1805 = vpack.c.b16 %v1476, %v1475
    %v1806 = vpack.c.b16 %v1478, %v1477
    %v1807 = vpack.c.b16 %v1480, %v1479
    %v1808 = vpack.c.b16 %v1482, %v1481
    %v1809 = vpack.c.b16 %v1484, %v1483
    %v1810 = vpack.c.b16 %v1486, %v1485
    %v1811 = vpack.c.b16 %v1488, %v1487
    %v1812 = vpack.c.b16 %v1490, %v1489
    %v1813 = vpack.c.b16 %v1492, %v1491
    %v1814 = vpack.c.b16 %v1494, %v1493
    %v1815 = vpack.c.b16 %v1496, %v1495
    %v1816 = vpack.c.b16 %v1498, %v1497
    %v1817 = vpack.c.b16 %v1500, %v1499
    %v1818 = vpack.c.b16 %v1502, %v1501
    %v1819 = vpack.c.b16 %v1504, %v1503
    %v1820 = vpack.c.b16 %v1506, %v1505
    %v1821 = vpack.c.b16 %v1508, %v1507
    %v1822 = vpack.c.b16 %v1510, %v1509
    %v1823 = vpack.c.b16 %v1512, %v1511
    %v1824 = vpack.c.b16 %v1514, %v1513
    %v1825 = vpack.c.b16 %v1516, %v1515
    %v1826 = vpack.c.b16 %v1518, %v1517
    %v1827 = vpack.c.b16 %v1520, %v1519
    %v1828 = vpack.c.b16 %v1522, %v1521
    %v1829 = vpack.c.b16 %v1524, %v1523
    %v1830 = vpack.c.b16 %v1526, %v1525
    %v1831 = vpack.c.b16 %v1528, %v1527
    %v1832 = vpack.c.b16 %v1530, %v1529
    %v1833 = vpack.c.b16 %v1532, %v1531
    %v1834 = vpack.c.b16 %v1534, %v1533
    %v1835 = vpack.c.b16 %v1536, %v1535
    %v1836 = vpack.c.b16 %v1538, %v1537
    %v1837 = vpack.c.b16 %v1540, %v1539
    %v1838 = vpack.c.b16 %v1542, %v1541
    %v1839 = vpack.c.b16 %v1544, %v1543
    %v1840 = vpack.c.b16 %v1546, %v1545
    %v1841 = vpack.c.b16 %v1548, %v1547
    %v1842 = vpack.c.b16 %v1550, %v1549
    %v1843 = vpack.c.b16 %v1552, %v1551
    %v1844 = vpack.c.b16 %v1554, %v1553
    %v1845 = vpack.c.b16 %v1556, %v1555
    %v1846 = vpack.c.b16 %v1558, %v1557
    %v1847 = vpack.c.b16 %v1560, %v1559
    %v1848 = vpack.c.b16 %v1562, %v1561
    %v1849 = vpack.c.b16 %v1564, %v1563
    %v1850 = vpack.c.b16 %v1566, %v1565
    %v1851 = vpack.c.b16 %v1568, %v1567
    %v1852 = vpack.c.b16 %v1570, %v1569
    %v1853 = vpack.c.b16 %v1572, %v1571
    %v1854 = vpack.c.b16 %v1574, %v1573
    %v1855 = vpack.c.b16 %v1576, %v1575
    %v1856 = vpack.c.b16 %v1578, %v1577
    %v1857 = vpack.c.b16 %v1580, %v1579
    %v1858 = vpack.c.b16 %v1582, %v1581
    %v1859 = vpack.c.b16 %v1584, %v1583
    %v1860 = vpack.c.b16 %v1586, %v1585
    %v1861 = vpack.c.b16 %v1588, %v1587
    %v1862 = vpack.c.b16 %v1590, %v1589
    %v1863 = vpack.c.b16 %v1592, %v1591
    %v1864 = vpack.c.b16 %v1594, %v1593
    %v1865 = vpack.c.b16 %v1596, %v1595
    %v1866 = vpack.c.b16 %v1598, %v1597
    %v1867 = vpack.c.b16 %v1600, %v1599
    %v1868 = vpack.c.b16 %v1602, %v1601
    %v1869 = vpack.c.b16 %v1604, %v1603
    %v1870 = vpack.c.b16 %v1606, %v1605
    %v1871 = vpack.c.b16 %v1608, %v1607
    %v1872 = vpack.c.b16 %v1610, %v1609
    %v1873 = vpack.c.b16 %v1612, %v1611
    %v1874 = vpack.c.b16 %v1614, %v1613
    %v1875 = vpack.c.b16 %v1616, %v1615
    %v1876 = vpack.c.b16 %v1618, %v1617
    %v1877 = vpack.c.b16 %v1620, %v1619
    %v1878 = vpack.c.b16 %v1622, %v1621
    %2135 = vmatprep.subr.bf16.mxu0 0
    %2136 = vmatpush1.bf16.msra.mxu0 %v1623
    %2137 = vmatprep.subr.bf16.mxu0 0
    %2138 = vmatpush1.bf16.msra.mxu0 %v1624
    %2139 = vmatprep.subr.bf16.mxu0 0
    %2140 = vmatpush1.bf16.msra.mxu0 %v1625
    %2141 = vmatprep.subr.bf16.mxu0 0
    %2142 = vmatpush1.bf16.msra.mxu0 %v1626
    %2143 = vmatprep.subr.bf16.mxu0 0
    %2144 = vmatpush1.bf16.msra.mxu0 %v1627
    %2145 = vmatprep.subr.bf16.mxu0 0
    %2146 = vmatpush1.bf16.msra.mxu0 %v1628
    %2147 = vmatprep.subr.bf16.mxu0 0
    %2148 = vmatpush1.bf16.msra.mxu0 %v1629
    %2149 = vmatprep.subr.bf16.mxu0 0
    %2150 = vmatpush1.bf16.msra.mxu0 %v1630
    %2151 = vmatprep.subr.bf16.mxu0 0
    %2152 = vmatpush1.bf16.msra.mxu0 %v1631
    %2153 = vmatprep.subr.bf16.mxu0 0
    %2154 = vmatpush1.bf16.msra.mxu0 %v1632
    %2155 = vmatprep.subr.bf16.mxu0 0
    %2156 = vmatpush1.bf16.msra.mxu0 %v1633
    %2157 = vmatprep.subr.bf16.mxu0 0
    %2158 = vmatpush1.bf16.msra.mxu0 %v1634
    %2159 = vmatprep.subr.bf16.mxu0 0
    %2160 = vmatpush1.bf16.msra.mxu0 %v1635
    %2161 = vmatprep.subr.bf16.mxu0 0
    %2162 = vmatpush1.bf16.msra.mxu0 %v1636
    %2163 = vmatprep.subr.bf16.mxu0 0
    %2164 = vmatpush1.bf16.msra.mxu0 %v1637
    %2165 = vmatprep.subr.bf16.mxu0 0
    %2166 = vmatpush1.bf16.msra.mxu0 %v1638
    %2167 = vmatprep.mubr.bf16.mxu0 %v49
    %2168 = vmatmul.mubr.bf16.gmra.mrb[0].mxu0 %v48
    %v2169 = vpop.f32.mrb[0].mxu0
    %v2170 = vadd.f32 %v597, %v2169
    %v2171 = vpop.f32.mrb[0].mxu0
    %v2172 = vpop.f32.mrb[0].mxu0
    %v2173 = vpop.f32.mrb[0].mxu0
    %2174 = vdwg.mxu0
    %2175 = vmatprep.subr.bf16.mxu0 0
    %2176 = vmatpush1.bf16.msra.mxu0 %v1639
    %2177 = vmatprep.subr.bf16.mxu0 0
    %2178 = vmatpush1.bf16.msra.mxu0 %v1640
    %2179 = vmatprep.subr.bf16.mxu0 0
    %2180 = vmatpush1.bf16.msra.mxu0 %v1641
    %2181 = vmatprep.subr.bf16.mxu0 0
    %2182 = vmatpush1.bf16.msra.mxu0 %v1642
    %2183 = vmatprep.subr.bf16.mxu0 0
    %2184 = vmatpush1.bf16.msra.mxu0 %v1643
    %2185 = vmatprep.subr.bf16.mxu0 0
    %2186 = vmatpush1.bf16.msra.mxu0 %v1644
    %2187 = vmatprep.subr.bf16.mxu0 0
    %2188 = vmatpush1.bf16.msra.mxu0 %v1645
    %2189 = vmatprep.subr.bf16.mxu0 0
    %2190 = vmatpush1.bf16.msra.mxu0 %v1646
    %2191 = vmatprep.subr.bf16.mxu0 0
    %2192 = vmatpush1.bf16.msra.mxu0 %v1647
    %2193 = vmatprep.subr.bf16.mxu0 0
    %2194 = vmatpush1.bf16.msra.mxu0 %v1648
    %2195 = vmatprep.subr.bf16.mxu0 0
    %2196 = vmatpush1.bf16.msra.mxu0 %v1649
    %2197 = vmatprep.subr.bf16.mxu0 0
    %2198 = vmatpush1.bf16.msra.mxu0 %v1650
    %2199 = vmatprep.subr.bf16.mxu0 0
    %2200 = vmatpush1.bf16.msra.mxu0 %v1651
    %2201 = vmatprep.subr.bf16.mxu0 0
    %2202 = vmatpush1.bf16.msra.mxu0 %v1652
    %2203 = vmatprep.subr.bf16.mxu0 0
    %2204 = vmatpush1.bf16.msra.mxu0 %v1653
    %2205 = vmatprep.subr.bf16.mxu0 0
    %2206 = vmatpush1.bf16.msra.mxu0 %v1654
    %2207 = vmatprep.mubr.bf16.mxu0 %v51
    %2208 = vmatmul.mubr.bf16.gmra.mrb[0].mxu0 %v50
    %v2209 = vpop.f32.mrb[0].mxu0
    %v2210 = vadd.f32 %v2170, %v2209
    %v2211 = vpop.f32.mrb[0].mxu0
    %v2212 = vpop.f32.mrb[0].mxu0
    %v2213 = vpop.f32.mrb[0].mxu0
    %2214 = vdwg.mxu0
    %2215 = vmatprep.subr.bf16.mxu0 0
    %2216 = vmatpush1.bf16.msra.mxu0 %v1655
    %2217 = vmatprep.subr.bf16.mxu0 0
    %2218 = vmatpush1.bf16.msra.mxu0 %v1656
    %2219 = vmatprep.subr.bf16.mxu0 0
    %2220 = vmatpush1.bf16.msra.mxu0 %v1657
    %2221 = vmatprep.subr.bf16.mxu0 0
    %2222 = vmatpush1.bf16.msra.mxu0 %v1658
    %2223 = vmatprep.subr.bf16.mxu0 0
    %2224 = vmatpush1.bf16.msra.mxu0 %v1659
    %2225 = vmatprep.subr.bf16.mxu0 0
    %2226 = vmatpush1.bf16.msra.mxu0 %v1660
    %2227 = vmatprep.subr.bf16.mxu0 0
    %2228 = vmatpush1.bf16.msra.mxu0 %v1661
    %2229 = vmatprep.subr.bf16.mxu0 0
    %2230 = vmatpush1.bf16.msra.mxu0 %v1662
    %2231 = vmatprep.subr.bf16.mxu0 0
    %2232 = vmatpush1.bf16.msra.mxu0 %v1663
    %2233 = vmatprep.subr.bf16.mxu0 0
    %2234 = vmatpush1.bf16.msra.mxu0 %v1664
    %2235 = vmatprep.subr.bf16.mxu0 0
    %2236 = vmatpush1.bf16.msra.mxu0 %v1665
    %2237 = vmatprep.subr.bf16.mxu0 0
    %2238 = vmatpush1.bf16.msra.mxu0 %v1666
    %2239 = vmatprep.subr.bf16.mxu0 0
    %2240 = vmatpush1.bf16.msra.mxu0 %v1667
    %2241 = vmatprep.subr.bf16.mxu0 0
    %2242 = vmatpush1.bf16.msra.mxu0 %v1668
    %2243 = vmatprep.subr.bf16.mxu0 0
    %2244 = vmatpush1.bf16.msra.mxu0 %v1669
    %2245 = vmatprep.subr.bf16.mxu0 0
    %2246 = vmatpush1.bf16.msra.mxu0 %v1670
    %2247 = vmatprep.mubr.bf16.mxu0 %v53
    %2248 = vmatmul.mubr.bf16.gmra.mrb[0].mxu0 %v52
    %v2249 = vpop.f32.mrb[0].mxu0
    %v2250 = vadd.f32 %v2210, %v2249
    %v2251 = vpop.f32.mrb[0].mxu0
    %v2252 = vpop.f32.mrb[0].mxu0
    %v2253 = vpop.f32.mrb[0].mxu0
    %2254 = vdwg.mxu0
    %2255 = vmatprep.subr.bf16.mxu0 0
    %2256 = vmatpush1.bf16.msra.mxu0 %v1671
    %2257 = vmatprep.subr.bf16.mxu0 0
    %2258 = vmatpush1.bf16.msra.mxu0 %v1672
    %2259 = vmatprep.subr.bf16.mxu0 0
    %2260 = vmatpush1.bf16.msra.mxu0 %v1673
    %2261 = vmatprep.subr.bf16.mxu0 0
    %2262 = vmatpush1.bf16.msra.mxu0 %v1674
    %2263 = vmatprep.subr.bf16.mxu0 0
    %2264 = vmatpush1.bf16.msra.mxu0 %v1675
    %2265 = vmatprep.subr.bf16.mxu0 0
    %2266 = vmatpush1.bf16.msra.mxu0 %v1676
    %2267 = vmatprep.subr.bf16.mxu0 0
    %2268 = vmatpush1.bf16.msra.mxu0 %v1677
    %2269 = vmatprep.subr.bf16.mxu0 0
    %2270 = vmatpush1.bf16.msra.mxu0 %v1678
    %2271 = vmatprep.subr.bf16.mxu0 0
    %2272 = vmatpush1.bf16.msra.mxu0 %v1679
    %2273 = vmatprep.subr.bf16.mxu0 0
    %2274 = vmatpush1.bf16.msra.mxu0 %v1680
    %2275 = vmatprep.subr.bf16.mxu0 0
    %2276 = vmatpush1.bf16.msra.mxu0 %v1681
    %2277 = vmatprep.subr.bf16.mxu0 0
    %2278 = vmatpush1.bf16.msra.mxu0 %v1682
    %2279 = vmatprep.subr.bf16.mxu0 0
    %2280 = vmatpush1.bf16.msra.mxu0 %v1683
    %2281 = vmatprep.subr.bf16.mxu0 0
    %2282 = vmatpush1.bf16.msra.mxu0 %v1684
    %2283 = vmatprep.subr.bf16.mxu0 0
    %2284 = vmatpush1.bf16.msra.mxu0 %v1685
    %2285 = vmatprep.subr.bf16.mxu0 0
    %2286 = vmatpush1.bf16.msra.mxu0 %v1686
    %2287 = vmatprep.mubr.bf16.mxu0 %v55
    %2288 = vmatmul.mubr.bf16.gmra.mrb[0].mxu0 %v54
    %v2289 = vpop.f32.mrb[0].mxu0
    %v2290 = vadd.f32 %v2250, %v2289
    %v2291 = vpop.f32.mrb[0].mxu0
    %v2292 = vpop.f32.mrb[0].mxu0
    %v2293 = vpop.f32.mrb[0].mxu0
    %2294 = vdwg.mxu0
    %2295 = vmatprep.subr.bf16.mxu0 0
    %2296 = vmatpush1.bf16.msra.mxu0 %v1687
    %2297 = vmatprep.subr.bf16.mxu0 0
    %2298 = vmatpush1.bf16.msra.mxu0 %v1688
    %2299 = vmatprep.subr.bf16.mxu0 0
    %2300 = vmatpush1.bf16.msra.mxu0 %v1689
    %2301 = vmatprep.subr.bf16.mxu0 0
    %2302 = vmatpush1.bf16.msra.mxu0 %v1690
    %2303 = vmatprep.subr.bf16.mxu0 0
    %2304 = vmatpush1.bf16.msra.mxu0 %v1691
    %2305 = vmatprep.subr.bf16.mxu0 0
    %2306 = vmatpush1.bf16.msra.mxu0 %v1692
    %2307 = vmatprep.subr.bf16.mxu0 0
    %2308 = vmatpush1.bf16.msra.mxu0 %v1693
    %2309 = vmatprep.subr.bf16.mxu0 0
    %2310 = vmatpush1.bf16.msra.mxu0 %v1694
    %2311 = vmatprep.subr.bf16.mxu0 0
    %2312 = vmatpush1.bf16.msra.mxu0 %v1695
    %2313 = vmatprep.subr.bf16.mxu0 0
    %2314 = vmatpush1.bf16.msra.mxu0 %v1696
    %2315 = vmatprep.subr.bf16.mxu0 0
    %2316 = vmatpush1.bf16.msra.mxu0 %v1697
    %2317 = vmatprep.subr.bf16.mxu0 0
    %2318 = vmatpush1.bf16.msra.mxu0 %v1698
    %2319 = vmatprep.subr.bf16.mxu0 0
    %2320 = vmatpush1.bf16.msra.mxu0 %v1699
    %2321 = vmatprep.subr.bf16.mxu0 0
    %2322 = vmatpush1.bf16.msra.mxu0 %v1700
    %2323 = vmatprep.subr.bf16.mxu0 0
    %2324 = vmatpush1.bf16.msra.mxu0 %v1701
    %2325 = vmatprep.subr.bf16.mxu0 0
    %2326 = vmatpush1.bf16.msra.mxu0 %v1702
    %2327 = vmatprep.mubr.bf16.mxu0 %v57
    %2328 = vmatmul.mubr.bf16.gmra.mrb[0].mxu0 %v56
    %v2329 = vpop.f32.mrb[0].mxu0
    %v2330 = vadd.f32 %v2290, %v2329
    %v2331 = vpop.f32.mrb[0].mxu0
    %v2332 = vpop.f32.mrb[0].mxu0
    %v2333 = vpop.f32.mrb[0].mxu0
    %2334 = vdwg.mxu0
    %2335 = vmatprep.subr.bf16.mxu0 0
    %2336 = vmatpush1.bf16.msra.mxu0 %v1703
    %2337 = vmatprep.subr.bf16.mxu0 0
    %2338 = vmatpush1.bf16.msra.mxu0 %v1704
    %2339 = vmatprep.subr.bf16.mxu0 0
    %2340 = vmatpush1.bf16.msra.mxu0 %v1705
    %2341 = vmatprep.subr.bf16.mxu0 0
    %2342 = vmatpush1.bf16.msra.mxu0 %v1706
    %2343 = vmatprep.subr.bf16.mxu0 0
    %2344 = vmatpush1.bf16.msra.mxu0 %v1707
    %2345 = vmatprep.subr.bf16.mxu0 0
    %2346 = vmatpush1.bf16.msra.mxu0 %v1708
    %2347 = vmatprep.subr.bf16.mxu0 0
    %2348 = vmatpush1.bf16.msra.mxu0 %v1709
    %2349 = vmatprep.subr.bf16.mxu0 0
    %2350 = vmatpush1.bf16.msra.mxu0 %v1710
    %2351 = vmatprep.subr.bf16.mxu0 0
    %2352 = vmatpush1.bf16.msra.mxu0 %v1711
    %2353 = vmatprep.subr.bf16.mxu0 0
    %2354 = vmatpush1.bf16.msra.mxu0 %v1712
    %2355 = vmatprep.subr.bf16.mxu0 0
    %2356 = vmatpush1.bf16.msra.mxu0 %v1713
    %2357 = vmatprep.subr.bf16.mxu0 0
    %2358 = vmatpush1.bf16.msra.mxu0 %v1714
    %2359 = vmatprep.subr.bf16.mxu0 0
    %2360 = vmatpush1.bf16.msra.mxu0 %v1715
    %2361 = vmatprep.subr.bf16.mxu0 0
    %2362 = vmatpush1.bf16.msra.mxu0 %v1716
    %2363 = vmatprep.subr.bf16.mxu0 0
    %2364 = vmatpush1.bf16.msra.mxu0 %v1717
    %2365 = vmatprep.subr.bf16.mxu0 0
    %2366 = vmatpush1.bf16.msra.mxu0 %v1718
    %2367 = vmatprep.mubr.bf16.mxu0 %v59
    %2368 = vmatmul.mubr.bf16.gmra.mrb[0].mxu0 %v58
    %v2369 = vpop.f32.mrb[0].mxu0
    %v2370 = vadd.f32 %v2330, %v2369
    %v2371 = vpop.f32.mrb[0].mxu0
    %v2372 = vpop.f32.mrb[0].mxu0
    %v2373 = vpop.f32.mrb[0].mxu0
    %2374 = vdwg.mxu0
    %2375 = vmatprep.subr.bf16.mxu0 0
    %2376 = vmatpush1.bf16.msra.mxu0 %v1719
    %2377 = vmatprep.subr.bf16.mxu0 0
    %2378 = vmatpush1.bf16.msra.mxu0 %v1720
    %2379 = vmatprep.subr.bf16.mxu0 0
    %2380 = vmatpush1.bf16.msra.mxu0 %v1721
    %2381 = vmatprep.subr.bf16.mxu0 0
    %2382 = vmatpush1.bf16.msra.mxu0 %v1722
    %2383 = vmatprep.subr.bf16.mxu0 0
    %2384 = vmatpush1.bf16.msra.mxu0 %v1723
    %2385 = vmatprep.subr.bf16.mxu0 0
    %2386 = vmatpush1.bf16.msra.mxu0 %v1724
    %2387 = vmatprep.subr.bf16.mxu0 0
    %2388 = vmatpush1.bf16.msra.mxu0 %v1725
    %2389 = vmatprep.subr.bf16.mxu0 0
    %2390 = vmatpush1.bf16.msra.mxu0 %v1726
    %2391 = vmatprep.subr.bf16.mxu0 0
    %2392 = vmatpush1.bf16.msra.mxu0 %v1727
    %2393 = vmatprep.subr.bf16.mxu0 0
    %2394 = vmatpush1.bf16.msra.mxu0 %v1728
    %2395 = vmatprep.subr.bf16.mxu0 0
    %2396 = vmatpush1.bf16.msra.mxu0 %v1729
    %2397 = vmatprep.subr.bf16.mxu0 0
    %2398 = vmatpush1.bf16.msra.mxu0 %v1730
    %2399 = vmatprep.subr.bf16.mxu0 0
    %2400 = vmatpush1.bf16.msra.mxu0 %v1731
    %2401 = vmatprep.subr.bf16.mxu0 0
    %2402 = vmatpush1.bf16.msra.mxu0 %v1732
    %2403 = vmatprep.subr.bf16.mxu0 0
    %2404 = vmatpush1.bf16.msra.mxu0 %v1733
    %2405 = vmatprep.subr.bf16.mxu0 0
    %2406 = vmatpush1.bf16.msra.mxu0 %v1734
    %2407 = vmatprep.mubr.bf16.mxu0 %v61
    %2408 = vmatmul.mubr.bf16.gmra.mrb[0].mxu0 %v60
    %v2409 = vpop.f32.mrb[0].mxu0
    %v2410 = vadd.f32 %v2370, %v2409
    %v2411 = vpop.f32.mrb[0].mxu0
    %v2412 = vpop.f32.mrb[0].mxu0
    %v2413 = vpop.f32.mrb[0].mxu0
    %2414 = vdwg.mxu0
    %2415 = vmatprep.subr.bf16.mxu0 0
    %2416 = vmatpush1.bf16.msra.mxu0 %v1735
    %2417 = vmatprep.subr.bf16.mxu0 0
    %2418 = vmatpush1.bf16.msra.mxu0 %v1736
    %2419 = vmatprep.subr.bf16.mxu0 0
    %2420 = vmatpush1.bf16.msra.mxu0 %v1737
    %2421 = vmatprep.subr.bf16.mxu0 0
    %2422 = vmatpush1.bf16.msra.mxu0 %v1738
    %2423 = vmatprep.subr.bf16.mxu0 0
    %2424 = vmatpush1.bf16.msra.mxu0 %v1739
    %2425 = vmatprep.subr.bf16.mxu0 0
    %2426 = vmatpush1.bf16.msra.mxu0 %v1740
    %2427 = vmatprep.subr.bf16.mxu0 0
    %2428 = vmatpush1.bf16.msra.mxu0 %v1741
    %2429 = vmatprep.subr.bf16.mxu0 0
    %2430 = vmatpush1.bf16.msra.mxu0 %v1742
    %2431 = vmatprep.subr.bf16.mxu0 0
    %2432 = vmatpush1.bf16.msra.mxu0 %v1743
    %2433 = vmatprep.subr.bf16.mxu0 0
    %2434 = vmatpush1.bf16.msra.mxu0 %v1744
    %2435 = vmatprep.subr.bf16.mxu0 0
    %2436 = vmatpush1.bf16.msra.mxu0 %v1745
    %2437 = vmatprep.subr.bf16.mxu0 0
    %2438 = vmatpush1.bf16.msra.mxu0 %v1746
    %2439 = vmatprep.subr.bf16.mxu0 0
    %2440 = vmatpush1.bf16.msra.mxu0 %v1747
    %2441 = vmatprep.subr.bf16.mxu0 0
    %2442 = vmatpush1.bf16.msra.mxu0 %v1748
    %2443 = vmatprep.subr.bf16.mxu0 0
    %2444 = vmatpush1.bf16.msra.mxu0 %v1749
    %2445 = vmatprep.subr.bf16.mxu0 0
    %2446 = vmatpush1.bf16.msra.mxu0 %v1750
    %2447 = vmatprep.mubr.bf16.mxu0 %v63
    %2448 = vmatmul.mubr.bf16.gmra.mrb[0].mxu0 %v62
    %v2449 = vpop.f32.mrb[0].mxu0
    %v2450 = vadd.f32 %v2410, %v2449
    %v2451 = vpop.f32.mrb[0].mxu0
    %v2452 = vpop.f32.mrb[0].mxu0
    %v2453 = vpop.f32.mrb[0].mxu0
    %2454 = vdwg.mxu0
    %2455 = vmatprep.subr.bf16.mxu0 0
    %2456 = vmatpush1.bf16.msra.mxu0 %v1751
    %2457 = vmatprep.subr.bf16.mxu0 0
    %2458 = vmatpush1.bf16.msra.mxu0 %v1752
    %2459 = vmatprep.subr.bf16.mxu0 0
    %2460 = vmatpush1.bf16.msra.mxu0 %v1753
    %2461 = vmatprep.subr.bf16.mxu0 0
    %2462 = vmatpush1.bf16.msra.mxu0 %v1754
    %2463 = vmatprep.subr.bf16.mxu0 0
    %2464 = vmatpush1.bf16.msra.mxu0 %v1755
    %2465 = vmatprep.subr.bf16.mxu0 0
    %2466 = vmatpush1.bf16.msra.mxu0 %v1756
    %2467 = vmatprep.subr.bf16.mxu0 0
    %2468 = vmatpush1.bf16.msra.mxu0 %v1757
    %2469 = vmatprep.subr.bf16.mxu0 0
    %2470 = vmatpush1.bf16.msra.mxu0 %v1758
    %2471 = vmatprep.subr.bf16.mxu0 0
    %2472 = vmatpush1.bf16.msra.mxu0 %v1759
    %2473 = vmatprep.subr.bf16.mxu0 0
    %2474 = vmatpush1.bf16.msra.mxu0 %v1760
    %2475 = vmatprep.subr.bf16.mxu0 0
    %2476 = vmatpush1.bf16.msra.mxu0 %v1761
    %2477 = vmatprep.subr.bf16.mxu0 0
    %2478 = vmatpush1.bf16.msra.mxu0 %v1762
    %2479 = vmatprep.subr.bf16.mxu0 0
    %2480 = vmatpush1.bf16.msra.mxu0 %v1763
    %2481 = vmatprep.subr.bf16.mxu0 0
    %2482 = vmatpush1.bf16.msra.mxu0 %v1764
    %2483 = vmatprep.subr.bf16.mxu0 0
    %2484 = vmatpush1.bf16.msra.mxu0 %v1765
    %2485 = vmatprep.subr.bf16.mxu0 0
    %2486 = vmatpush1.bf16.msra.mxu0 %v1766
    %2487 = vmatprep.mubr.bf16.mxu0 %v65
    %2488 = vmatmul.mubr.bf16.gmra.mrb[0].mxu0 %v64
    %v2489 = vpop.f32.mrb[0].mxu0
    %v2490 = vadd.f32 %v2450, %v2489
    %v2491 = vpop.f32.mrb[0].mxu0
    %v2492 = vpop.f32.mrb[0].mxu0
    %v2493 = vpop.f32.mrb[0].mxu0
    %2494 = vdwg.mxu0
    %2495 = vmatprep.subr.bf16.mxu0 0
    %2496 = vmatpush1.bf16.msra.mxu0 %v1767
    %2497 = vmatprep.subr.bf16.mxu0 0
    %2498 = vmatpush1.bf16.msra.mxu0 %v1768
    %2499 = vmatprep.subr.bf16.mxu0 0
    %2500 = vmatpush1.bf16.msra.mxu0 %v1769
    %2501 = vmatprep.subr.bf16.mxu0 0
    %2502 = vmatpush1.bf16.msra.mxu0 %v1770
    %2503 = vmatprep.subr.bf16.mxu0 0
    %2504 = vmatpush1.bf16.msra.mxu0 %v1771
    %2505 = vmatprep.subr.bf16.mxu0 0
    %2506 = vmatpush1.bf16.msra.mxu0 %v1772
    %2507 = vmatprep.subr.bf16.mxu0 0
    %2508 = vmatpush1.bf16.msra.mxu0 %v1773
    %2509 = vmatprep.subr.bf16.mxu0 0
    %2510 = vmatpush1.bf16.msra.mxu0 %v1774
    %2511 = vmatprep.subr.bf16.mxu0 0
    %2512 = vmatpush1.bf16.msra.mxu0 %v1775
    %2513 = vmatprep.subr.bf16.mxu0 0
    %2514 = vmatpush1.bf16.msra.mxu0 %v1776
    %2515 = vmatprep.subr.bf16.mxu0 0
    %2516 = vmatpush1.bf16.msra.mxu0 %v1777
    %2517 = vmatprep.subr.bf16.mxu0 0
    %2518 = vmatpush1.bf16.msra.mxu0 %v1778
    %2519 = vmatprep.subr.bf16.mxu0 0
    %2520 = vmatpush1.bf16.msra.mxu0 %v1779
    %2521 = vmatprep.subr.bf16.mxu0 0
    %2522 = vmatpush1.bf16.msra.mxu0 %v1780
    %2523 = vmatprep.subr.bf16.mxu0 0
    %2524 = vmatpush1.bf16.msra.mxu0 %v1781
    %2525 = vmatprep.subr.bf16.mxu0 0
    %2526 = vmatpush1.bf16.msra.mxu0 %v1782
    %2527 = vmatprep.mubr.bf16.mxu0 %v67
    %2528 = vmatmul.mubr.bf16.gmra.mrb[0].mxu0 %v66
    %v2529 = vpop.f32.mrb[0].mxu0
    %v2530 = vadd.f32 %v2490, %v2529
    %v2531 = vpop.f32.mrb[0].mxu0
    %v2532 = vpop.f32.mrb[0].mxu0
    %v2533 = vpop.f32.mrb[0].mxu0
    %2534 = vdwg.mxu0
    %2535 = vmatprep.subr.bf16.mxu0 0
    %2536 = vmatpush1.bf16.msra.mxu0 %v1783
    %2537 = vmatprep.subr.bf16.mxu0 0
    %2538 = vmatpush1.bf16.msra.mxu0 %v1784
    %2539 = vmatprep.subr.bf16.mxu0 0
    %2540 = vmatpush1.bf16.msra.mxu0 %v1785
    %2541 = vmatprep.subr.bf16.mxu0 0
    %2542 = vmatpush1.bf16.msra.mxu0 %v1786
    %2543 = vmatprep.subr.bf16.mxu0 0
    %2544 = vmatpush1.bf16.msra.mxu0 %v1787
    %2545 = vmatprep.subr.bf16.mxu0 0
    %2546 = vmatpush1.bf16.msra.mxu0 %v1788
    %2547 = vmatprep.subr.bf16.mxu0 0
    %2548 = vmatpush1.bf16.msra.mxu0 %v1789
    %2549 = vmatprep.subr.bf16.mxu0 0
    %2550 = vmatpush1.bf16.msra.mxu0 %v1790
    %2551 = vmatprep.subr.bf16.mxu0 0
    %2552 = vmatpush1.bf16.msra.mxu0 %v1791
    %2553 = vmatprep.subr.bf16.mxu0 0
    %2554 = vmatpush1.bf16.msra.mxu0 %v1792
    %2555 = vmatprep.subr.bf16.mxu0 0
    %2556 = vmatpush1.bf16.msra.mxu0 %v1793
    %2557 = vmatprep.subr.bf16.mxu0 0
    %2558 = vmatpush1.bf16.msra.mxu0 %v1794
    %2559 = vmatprep.subr.bf16.mxu0 0
    %2560 = vmatpush1.bf16.msra.mxu0 %v1795
    %2561 = vmatprep.subr.bf16.mxu0 0
    %2562 = vmatpush1.bf16.msra.mxu0 %v1796
    %2563 = vmatprep.subr.bf16.mxu0 0
    %2564 = vmatpush1.bf16.msra.mxu0 %v1797
    %2565 = vmatprep.subr.bf16.mxu0 0
    %2566 = vmatpush1.bf16.msra.mxu0 %v1798
    %2567 = vmatprep.mubr.bf16.mxu0 %v69
    %2568 = vmatmul.mubr.bf16.gmra.mrb[0].mxu0 %v68
    %v2569 = vpop.f32.mrb[0].mxu0
    %v2570 = vadd.f32 %v2530, %v2569
    %v2571 = vpop.f32.mrb[0].mxu0
    %v2572 = vpop.f32.mrb[0].mxu0
    %v2573 = vpop.f32.mrb[0].mxu0
    %2574 = vdwg.mxu0
    %2575 = vmatprep.subr.bf16.mxu0 0
    %2576 = vmatpush1.bf16.msra.mxu0 %v1799
    %2577 = vmatprep.subr.bf16.mxu0 0
    %2578 = vmatpush1.bf16.msra.mxu0 %v1800
    %2579 = vmatprep.subr.bf16.mxu0 0
    %2580 = vmatpush1.bf16.msra.mxu0 %v1801
    %2581 = vmatprep.subr.bf16.mxu0 0
    %2582 = vmatpush1.bf16.msra.mxu0 %v1802
    %2583 = vmatprep.subr.bf16.mxu0 0
    %2584 = vmatpush1.bf16.msra.mxu0 %v1803
    %2585 = vmatprep.subr.bf16.mxu0 0
    %2586 = vmatpush1.bf16.msra.mxu0 %v1804
    %2587 = vmatprep.subr.bf16.mxu0 0
    %2588 = vmatpush1.bf16.msra.mxu0 %v1805
    %2589 = vmatprep.subr.bf16.mxu0 0
    %2590 = vmatpush1.bf16.msra.mxu0 %v1806
    %2591 = vmatprep.subr.bf16.mxu0 0
    %2592 = vmatpush1.bf16.msra.mxu0 %v1807
    %2593 = vmatprep.subr.bf16.mxu0 0
    %2594 = vmatpush1.bf16.msra.mxu0 %v1808
    %2595 = vmatprep.subr.bf16.mxu0 0
    %2596 = vmatpush1.bf16.msra.mxu0 %v1809
    %2597 = vmatprep.subr.bf16.mxu0 0
    %2598 = vmatpush1.bf16.msra.mxu0 %v1810
    %2599 = vmatprep.subr.bf16.mxu0 0
    %2600 = vmatpush1.bf16.msra.mxu0 %v1811
    %2601 = vmatprep.subr.bf16.mxu0 0
    %2602 = vmatpush1.bf16.msra.mxu0 %v1812
    %2603 = vmatprep.subr.bf16.mxu0 0
    %2604 = vmatpush1.bf16.msra.mxu0 %v1813
    %2605 = vmatprep.subr.bf16.mxu0 0
    %2606 = vmatpush1.bf16.msra.mxu0 %v1814
    %2607 = vmatprep.mubr.bf16.mxu0 %v71
    %2608 = vmatmul.mubr.bf16.gmra.mrb[0].mxu0 %v70
    %v2609 = vpop.f32.mrb[0].mxu0
    %v2610 = vadd.f32 %v2570, %v2609
    %v2611 = vpop.f32.mrb[0].mxu0
    %v2612 = vpop.f32.mrb[0].mxu0
    %v2613 = vpop.f32.mrb[0].mxu0
    %2614 = vdwg.mxu0
    %2615 = vmatprep.subr.bf16.mxu0 0
    %2616 = vmatpush1.bf16.msra.mxu0 %v1815
    %2617 = vmatprep.subr.bf16.mxu0 0
    %2618 = vmatpush1.bf16.msra.mxu0 %v1816
    %2619 = vmatprep.subr.bf16.mxu0 0
    %2620 = vmatpush1.bf16.msra.mxu0 %v1817
    %2621 = vmatprep.subr.bf16.mxu0 0
    %2622 = vmatpush1.bf16.msra.mxu0 %v1818
    %2623 = vmatprep.subr.bf16.mxu0 0
    %2624 = vmatpush1.bf16.msra.mxu0 %v1819
    %2625 = vmatprep.subr.bf16.mxu0 0
    %2626 = vmatpush1.bf16.msra.mxu0 %v1820
    %2627 = vmatprep.subr.bf16.mxu0 0
    %2628 = vmatpush1.bf16.msra.mxu0 %v1821
    %2629 = vmatprep.subr.bf16.mxu0 0
    %2630 = vmatpush1.bf16.msra.mxu0 %v1822
    %2631 = vmatprep.subr.bf16.mxu0 0
    %2632 = vmatpush1.bf16.msra.mxu0 %v1823
    %2633 = vmatprep.subr.bf16.mxu0 0
    %2634 = vmatpush1.bf16.msra.mxu0 %v1824
    %2635 = vmatprep.subr.bf16.mxu0 0
    %2636 = vmatpush1.bf16.msra.mxu0 %v1825
    %2637 = vmatprep.subr.bf16.mxu0 0
    %2638 = vmatpush1.bf16.msra.mxu0 %v1826
    %2639 = vmatprep.subr.bf16.mxu0 0
    %2640 = vmatpush1.bf16.msra.mxu0 %v1827
    %2641 = vmatprep.subr.bf16.mxu0 0
    %2642 = vmatpush1.bf16.msra.mxu0 %v1828
    %2643 = vmatprep.subr.bf16.mxu0 0
    %2644 = vmatpush1.bf16.msra.mxu0 %v1829
    %2645 = vmatprep.subr.bf16.mxu0 0
    %2646 = vmatpush1.bf16.msra.mxu0 %v1830
    %2647 = vmatprep.mubr.bf16.mxu0 %v73
    %2648 = vmatmul.mubr.bf16.gmra.mrb[0].mxu0 %v72
    %v2649 = vpop.f32.mrb[0].mxu0
    %v2650 = vadd.f32 %v2610, %v2649
    %v2651 = vpop.f32.mrb[0].mxu0
    %v2652 = vpop.f32.mrb[0].mxu0
    %v2653 = vpop.f32.mrb[0].mxu0
    %2654 = vdwg.mxu0
    %2655 = vmatprep.subr.bf16.mxu0 0
    %2656 = vmatpush1.bf16.msra.mxu0 %v1831
    %2657 = vmatprep.subr.bf16.mxu0 0
    %2658 = vmatpush1.bf16.msra.mxu0 %v1832
    %2659 = vmatprep.subr.bf16.mxu0 0
    %2660 = vmatpush1.bf16.msra.mxu0 %v1833
    %2661 = vmatprep.subr.bf16.mxu0 0
    %2662 = vmatpush1.bf16.msra.mxu0 %v1834
    %2663 = vmatprep.subr.bf16.mxu0 0
    %2664 = vmatpush1.bf16.msra.mxu0 %v1835
    %2665 = vmatprep.subr.bf16.mxu0 0
    %2666 = vmatpush1.bf16.msra.mxu0 %v1836
    %2667 = vmatprep.subr.bf16.mxu0 0
    %2668 = vmatpush1.bf16.msra.mxu0 %v1837
    %2669 = vmatprep.subr.bf16.mxu0 0
    %2670 = vmatpush1.bf16.msra.mxu0 %v1838
    %2671 = vmatprep.subr.bf16.mxu0 0
    %2672 = vmatpush1.bf16.msra.mxu0 %v1839
    %2673 = vmatprep.subr.bf16.mxu0 0
    %2674 = vmatpush1.bf16.msra.mxu0 %v1840
    %2675 = vmatprep.subr.bf16.mxu0 0
    %2676 = vmatpush1.bf16.msra.mxu0 %v1841
    %2677 = vmatprep.subr.bf16.mxu0 0
    %2678 = vmatpush1.bf16.msra.mxu0 %v1842
    %2679 = vmatprep.subr.bf16.mxu0 0
    %2680 = vmatpush1.bf16.msra.mxu0 %v1843
    %2681 = vmatprep.subr.bf16.mxu0 0
    %2682 = vmatpush1.bf16.msra.mxu0 %v1844
    %2683 = vmatprep.subr.bf16.mxu0 0
    %2684 = vmatpush1.bf16.msra.mxu0 %v1845
    %2685 = vmatprep.subr.bf16.mxu0 0
    %2686 = vmatpush1.bf16.msra.mxu0 %v1846
    %2687 = vmatprep.mubr.bf16.mxu0 %v75
    %2688 = vmatmul.mubr.bf16.gmra.mrb[0].mxu0 %v74
    %v2689 = vpop.f32.mrb[0].mxu0
    %v2690 = vadd.f32 %v2650, %v2689
    %v2691 = vpop.f32.mrb[0].mxu0
    %v2692 = vpop.f32.mrb[0].mxu0
    %v2693 = vpop.f32.mrb[0].mxu0
    %2694 = vdwg.mxu0
    %2695 = vmatprep.subr.bf16.mxu0 0
    %2696 = vmatpush1.bf16.msra.mxu0 %v1847
    %2697 = vmatprep.subr.bf16.mxu0 0
    %2698 = vmatpush1.bf16.msra.mxu0 %v1848
    %2699 = vmatprep.subr.bf16.mxu0 0
    %2700 = vmatpush1.bf16.msra.mxu0 %v1849
    %2701 = vmatprep.subr.bf16.mxu0 0
    %2702 = vmatpush1.bf16.msra.mxu0 %v1850
    %2703 = vmatprep.subr.bf16.mxu0 0
    %2704 = vmatpush1.bf16.msra.mxu0 %v1851
    %2705 = vmatprep.subr.bf16.mxu0 0
    %2706 = vmatpush1.bf16.msra.mxu0 %v1852
    %2707 = vmatprep.subr.bf16.mxu0 0
    %2708 = vmatpush1.bf16.msra.mxu0 %v1853
    %2709 = vmatprep.subr.bf16.mxu0 0
    %2710 = vmatpush1.bf16.msra.mxu0 %v1854
    %2711 = vmatprep.subr.bf16.mxu0 0
    %2712 = vmatpush1.bf16.msra.mxu0 %v1855
    %2713 = vmatprep.subr.bf16.mxu0 0
    %2714 = vmatpush1.bf16.msra.mxu0 %v1856
    %2715 = vmatprep.subr.bf16.mxu0 0
    %2716 = vmatpush1.bf16.msra.mxu0 %v1857
    %2717 = vmatprep.subr.bf16.mxu0 0
    %2718 = vmatpush1.bf16.msra.mxu0 %v1858
    %2719 = vmatprep.subr.bf16.mxu0 0
    %2720 = vmatpush1.bf16.msra.mxu0 %v1859
    %2721 = vmatprep.subr.bf16.mxu0 0
    %2722 = vmatpush1.bf16.msra.mxu0 %v1860
    %2723 = vmatprep.subr.bf16.mxu0 0
    %2724 = vmatpush1.bf16.msra.mxu0 %v1861
    %2725 = vmatprep.subr.bf16.mxu0 0
    %2726 = vmatpush1.bf16.msra.mxu0 %v1862
    %2727 = vmatprep.mubr.bf16.mxu0 %v77
    %2728 = vmatmul.mubr.bf16.gmra.mrb[0].mxu0 %v76
    %v2729 = vpop.f32.mrb[0].mxu0
    %v2730 = vadd.f32 %v2690, %v2729
    %v2731 = vpop.f32.mrb[0].mxu0
    %v2732 = vpop.f32.mrb[0].mxu0
    %v2733 = vpop.f32.mrb[0].mxu0
    %2734 = vdwg.mxu0
    %2735 = vmatprep.subr.bf16.mxu0 0
    %2736 = vmatpush1.bf16.msra.mxu0 %v1863
    %2737 = vmatprep.subr.bf16.mxu0 0
    %2738 = vmatpush1.bf16.msra.mxu0 %v1864
    %2739 = vmatprep.subr.bf16.mxu0 0
    %2740 = vmatpush1.bf16.msra.mxu0 %v1865
    %2741 = vmatprep.subr.bf16.mxu0 0
    %2742 = vmatpush1.bf16.msra.mxu0 %v1866
    %2743 = vmatprep.subr.bf16.mxu0 0
    %2744 = vmatpush1.bf16.msra.mxu0 %v1867
    %2745 = vmatprep.subr.bf16.mxu0 0
    %2746 = vmatpush1.bf16.msra.mxu0 %v1868
    %2747 = vmatprep.subr.bf16.mxu0 0
    %2748 = vmatpush1.bf16.msra.mxu0 %v1869
    %2749 = vmatprep.subr.bf16.mxu0 0
    %2750 = vmatpush1.bf16.msra.mxu0 %v1870
    %2751 = vmatprep.subr.bf16.mxu0 0
    %2752 = vmatpush1.bf16.msra.mxu0 %v1871
    %2753 = vmatprep.subr.bf16.mxu0 0
    %2754 = vmatpush1.bf16.msra.mxu0 %v1872
    %2755 = vmatprep.subr.bf16.mxu0 0
    %2756 = vmatpush1.bf16.msra.mxu0 %v1873
    %2757 = vmatprep.subr.bf16.mxu0 0
    %2758 = vmatpush1.bf16.msra.mxu0 %v1874
    %2759 = vmatprep.subr.bf16.mxu0 0
    %2760 = vmatpush1.bf16.msra.mxu0 %v1875
    %2761 = vmatprep.subr.bf16.mxu0 0
    %2762 = vmatpush1.bf16.msra.mxu0 %v1876
    %2763 = vmatprep.subr.bf16.mxu0 0
    %2764 = vmatpush1.bf16.msra.mxu0 %v1877
    %2765 = vmatprep.subr.bf16.mxu0 0
    %2766 = vmatpush1.bf16.msra.mxu0 %v1878
    %2767 = vmatprep.mubr.bf16.mxu0 %v79
    %2768 = vmatmul.mubr.bf16.gmra.mrb[0].mxu0 %v78
    %v2769 = vpop.f32.mrb[0].mxu0
    %v2770 = vadd.f32 %v2730, %v2769
    %v2771 = vpop.f32.mrb[0].mxu0
    %v2772 = vpop.f32.mrb[0].mxu0
    %v2773 = vpop.f32.mrb[0].mxu0
    %2774 = vdwg.mxu0
    %2775 = vst [vmem:[#allocation2] sm:$0xff] %v2770
    // Predicated region
    $region14: #{head_forward.1} parent=1 // pred_check
      _
    $region15: #{head_forward.1} parent=1 // pred_check_branch
      %2777 = sbr.rel (0) target = $region17
    $region16: #{head_forward.1} parent=1 // pred_region
      %s2779 = ssub.s32 128, 128
      %2780 = vsyncadd [#allocation3], %s2779
      %s2782 = sshll.u32 [#allocation2], 4
      %s2783 = int_to_ptr.vmem [resolvable:$true] %s2782
      %2785 = dma.vmem_to_hbm [thread:$0]  %s2783, 128, %s3, [#allocation3]
    $region17: #{head_forward.1} parent=1 // pred_fallthru
      _
    // Predicated region
    $region18: #{head_forward.1} parent=1 // pred_check
      _
    $region19: #{head_forward.1} parent=1 // pred_check_branch
      %2787 = sbr.rel (0) target = $region21
    $region20: #{head_forward.1} parent=1 // pred_region
      %2788 = dma.done [#allocation3], 128
    $region21: #{head_forward.1} parent=1 // pred_fallthru
      _
    %2789 = vsyncpa [#allocation3], 1

</llo_original>
